<compile_context>
chip_gen: v7x
topology: tpu7x:2x2x1
jax: 0.10.0
libtpu: 0.0.40
codegen_flags: <defaults>
</compile_context>

<pallas_src>
import numpy as np
import jax
import jax.numpy as jnp
from jax import lax
from jax.experimental import pallas as pl
from jax.experimental.pallas import tpu as pltpu


def correlation_forward(sr, idx_m):
    """Pallas version of Correlation.forward. Returns tmp: [maxm] min eigenvalues."""
    # ---- host preamble (shapes depend on molecule sizes; intentional host sync) ----
    idx_np = np.asarray(idx_m)
    maxm = int(idx_np[-1]) + 1
    counts = np.bincount(idx_np, minlength=maxm)[:maxm].astype(np.int64)  # torch.bincount
    offsets = np.concatenate([[0], np.cumsum(counts)]).astype(np.int64)

    n_atoms, F = sr.shape
    n_max = max(1, int(counts.max()))
    n_pad = ((n_max + 7) // 8) * 8          # sublane-aligned rows per molecule

    # Molecules per grid step: ~1024 padded rows/step amortizes per-step pipeline
    # overhead and stays far below VMEM limits on all generations; cap at ceil(maxm/2)
    # so num_steps >= 2 whenever maxm > 1 (keeps both v7x TensorCores busy).
    B = max(1, 1024 // n_pad)
    if maxm > 1:
        B = min(B, (maxm + 1) // 2)
    num_steps = -(-maxm // B)
    maxm_pad = num_steps * B

    # Host-built gather map (padding rows -> appended zero row) and padding-row mask.
    ar = np.arange(n_pad)
    gidx = np.full((maxm_pad, n_pad), n_atoms, dtype=np.int32)
    gidx[:maxm] = np.where(ar[None, :] < counts[:, None],
                           offsets[:maxm, None] + ar[None, :],
                           n_atoms).astype(np.int32)
    pad_mask = np.ones((maxm_pad, n_pad, 1), dtype=np.float32)
    pad_mask[:maxm, :, 0] = (ar[None, :] >= counts[:, None]).astype(np.float32)

    def gram_kernel(x_ref, m_ref, o_ref):
        # x_ref: (B, n_pad, F)    padded atom rows for B molecules (pad rows are zero)
        # m_ref: (B, n_pad, 1)    1.0 on padding rows, 0.0 on real atom rows
        # o_ref: (B, n_pad, n_pad) per-molecule Gram with sentinel on padded diagonal
        x = x_ref[...]
        # Batched Gram on the MXU; contracting the feature axis of both operands
        # avoids any explicit transpose. f32 operands kept (bf16 would not meet the
        # 1e-3 min-eigenvalue tolerance); accumulation in f32.
        g = jnp.einsum('bif,bjf->bij', x, x, preferred_element_type=jnp.float32)
        # trace(C) = sum of squares of x (pad rows contribute 0) -> sentinel > lambda_max,
        # so padded diagonal entries can never become the reported minimum eigenvalue.
        sq = jnp.sum(x * x, axis=2, keepdims=True)        # (B, n_pad, 1)
        trace = jnp.sum(sq, axis=1, keepdims=True)        # (B, 1, 1)
        i = lax.broadcasted_iota(jnp.int32, (n_pad, n_pad), 0)
        j = lax.broadcasted_iota(jnp.int32, (n_pad, n_pad), 1)
        eye = (i == j).astype(jnp.float32)                # (n_pad, n_pad)
        o_ref[...] = g + ((trace + 1.0) * m_ref[...]) * eye[None, :, :]

    gidx_j = jnp.asarray(gidx)
    mask_j = jnp.asarray(pad_mask)

    @jax.jit
    def device_path(sr_in, gidx_in, mask_in):
        sr_f32 = sr_in.astype(jnp.float32)
        sr_ext = jnp.concatenate([sr_f32, jnp.zeros((1, F), jnp.float32)], axis=0)
        # One fused XLA gather builds the molecule-padded slab (maxm_pad, n_pad, F).
        # TODO(synk): this slab round-trips HBM once; could be moved on-chip (one-hot
        # MXU gather / manual DMA) but it is no longer the dominant cost once the
        # kernel writes only diagonal Gram blocks.
        x = sr_ext[gidx_in]
        gblk = pl.pallas_call(
            gram_kernel,
            out_shape=jax.ShapeDtypeStruct((maxm_pad, n_pad, n_pad), jnp.float32),
            grid=(num_steps,),
            in_specs=[pl.BlockSpec((B, n_pad, F), lambda s: (s, 0, 0)),
                      pl.BlockSpec((B, n_pad, 1), lambda s: (s, 0, 0))],
            out_specs=pl.BlockSpec((B, n_pad, n_pad), lambda s: (s, 0, 0)),
            compiler_params=pltpu.CompilerParams(
                dimension_semantics=("parallel",)),
        )(x, mask_in)
        # TODO(synk): symmetric eigendecomposition has no Pallas/Mosaic primitive; one
        # batched XLA eigvalsh over [maxm, n_pad, n_pad] (ascending -> column 0 = min).
        # NOTE: a molecule index with zero atoms (possible with bincount) would crash
        # the torch reference; here it reports the sentinel (= 1.0) instead.
        ev = jnp.linalg.eigvalsh(gblk[:maxm])
        return ev[:, 0].astype(sr_in.dtype)

    return device_path(sr, gidx_j, mask_j)


if __name__ == "__main__":
    key = jax.random.PRNGKey(0)
    F = 32
    counts = [5, 8, 3]                                   # atoms per molecule
    n_atoms = sum(counts)
    idx_m = np.repeat(np.arange(len(counts)), counts).astype(np.int32)
    sr = jax.random.normal(key, (n_atoms, F), dtype=jnp.float32)

    y = jax.block_until_ready(correlation_forward(sr, idx_m))

    # reference (mirrors the torch forward exactly)
    ref, off = [], 0
    for c in counts:
        t = sr[off: off + c]
        off += c
        ref.append(jnp.linalg.eigvalsh(t @ t.T)[0])
    ref = jnp.stack(ref)

    assert y.shape == (len(counts),) and y.dtype == sr.dtype
    assert jnp.allclose(y, ref, rtol=1e-3, atol=1e-3), (y, ref)
    print("KERNEL_OK")
</pallas_src>

<mosaic_0001>
module attributes {stable_mosaic.version = 11 : i64} {
  func.func @gram_kernel(%arg0: i32, %arg1: memref<2x8x32xf32, #tpu.memory_space<vmem>>, %arg2: memref<2x8x1xf32, #tpu.memory_space<vmem>>, %arg3: memref<2x8x8xf32, #tpu.memory_space<vmem>>) attributes {dimension_semantics = [#tpu.dimension_semantics<parallel>], iteration_bounds = array<i64: 2>, scalar_prefetch = 0 : i64, scratch_operands = 0 : i64, tpu.core_type = #tpu.core_type<tc>, window_params = [{transform_indices = @transform_0, window_bounds = array<i64: 2, 8, 32>}, {transform_indices = @transform_1, window_bounds = array<i64: 2, 8, 1>}, {transform_indices = @transform_2, window_bounds = array<i64: 2, 8, 8>}]} {
    %c0 = arith.constant 0 : index
    %c0_0 = arith.constant 0 : index
    %c0_1 = arith.constant 0 : index
    %0 = vector.load %arg1[%c0, %c0_0, %c0_1] : memref<2x8x32xf32, #tpu.memory_space<vmem>>, vector<2x8x32xf32>
    "tpu.trace_start"() <{level = 10 : i32, message = "bif,bjf->bij"}> : () -> ()
    %cst = arith.constant dense<0.000000e+00> : vector<2x8x8xf32>
    %1 = tpu.matmul %0, %0, %cst {dimension_numbers = #tpu.dot_dimension_numbers<[2], [2], [1], [1], [0, 0, 0, 1, 1, 1], [0], [0]>} : vector<2x8x32xf32>, vector<2x8x32xf32>, vector<2x8x8xf32> -> vector<2x8x8xf32>
    "tpu.trace_stop"() : () -> ()
    %2 = arith.mulf %0, %0 : vector<2x8x32xf32>
    %cst_2 = arith.constant dense<0.000000e+00> : vector<2x8xf32>
    %3 = vector.multi_reduction <add>, %2, %cst_2 [2] : vector<2x8x32xf32> to vector<2x8xf32>
    %4 = vector.shape_cast %3 : vector<2x8xf32> to vector<2x8x1xf32>
    %cst_3 = arith.constant dense<0.000000e+00> : vector<2x1xf32>
    %5 = vector.multi_reduction <add>, %4, %cst_3 [1] : vector<2x8x1xf32> to vector<2x1xf32>
    %6 = vector.shape_cast %5 : vector<2x1xf32> to vector<2x1x1xf32>
    %7 = tpu.iota {dimensions = array<i32: 0>} : vector<8x8xi32>
    %8 = tpu.iota {dimensions = array<i32: 1>} : vector<8x8xi32>
    %9 = arith.cmpi eq, %7, %8 : vector<8x8xi32>
    %10 = arith.extui %9 : vector<8x8xi1> to vector<8x8xi32>
    %11 = arith.sitofp %10 : vector<8x8xi32> to vector<8x8xf32>
    %cst_4 = arith.constant 1.000000e+00 : f32
    %12 = vector.broadcast %cst_4 : f32 to vector<2x1x1xf32>
    %13 = arith.addf %6, %12 : vector<2x1x1xf32>
    %c0_5 = arith.constant 0 : index
    %c0_6 = arith.constant 0 : index
    %c0_7 = arith.constant 0 : index
    %14 = vector.load %arg2[%c0_5, %c0_6, %c0_7] : memref<2x8x1xf32, #tpu.memory_space<vmem>>, vector<2x8x1xf32>
    %15 = vector.broadcast %13 : vector<2x1x1xf32> to vector<2x8x1xf32>
    %16 = arith.mulf %15, %14 : vector<2x8x1xf32>
    %17 = vector.shape_cast %11 : vector<8x8xf32> to vector<1x8x8xf32>
    %18 = vector.broadcast %16 : vector<2x8x1xf32> to vector<2x8x8xf32>
    %19 = vector.broadcast %17 : vector<1x8x8xf32> to vector<2x8x8xf32>
    %20 = arith.mulf %18, %19 : vector<2x8x8xf32>
    %21 = arith.addf %1, %20 : vector<2x8x8xf32>
    %c0_8 = arith.constant 0 : index
    %c0_9 = arith.constant 0 : index
    %c0_10 = arith.constant 0 : index
    %22 = vector.load %arg3[%c0_8, %c0_9, %c0_10] : memref<2x8x8xf32, #tpu.memory_space<vmem>>, vector<2x8x8xf32>
    tpu.vector_store %arg3[%c0_8, %c0_9, %c0_10], %21 {strides = array<i32>} : memref<2x8x8xf32, #tpu.memory_space<vmem>>, vector<2x8x8xf32>,
    return
  }
  func.func @transform_0(%arg0: i32) -> (i32, i32, i32) {
    %c0_i32 = arith.constant 0 : i32
    %c0_i32_0 = arith.constant 0 : i32
    %c0_i32_1 = arith.constant 0 : i32
    return %arg0, %c0_i32, %c0_i32_0 : i32, i32, i32
  }
  func.func @transform_1(%arg0: i32) -> (i32, i32, i32) {
    %c0_i32 = arith.constant 0 : i32
    %c0_i32_0 = arith.constant 0 : i32
    %c0_i32_1 = arith.constant 0 : i32
    return %arg0, %c0_i32, %c0_i32_0 : i32, i32, i32
  }
  func.func @transform_2(%arg0: i32) -> (i32, i32, i32) {
    %c0_i32 = arith.constant 0 : i32
    %c0_i32_0 = arith.constant 0 : i32
    %c0_i32_1 = arith.constant 0 : i32
    return %arg0, %c0_i32, %c0_i32_0 : i32, i32, i32
  }
}

</mosaic_0001>

<llo_original>
// kernel: custom-call.3
$region0: #{custom-call.3}
  %s0 = inlined_call_operand.vmem [shape: f32[3,4,4], index: 0, kind: input, shape index: {}]
  %s1 = inlined_call_operand.vmem [shape: f32[3,4,4], index: 1, kind: input, shape index: {}]
  %s2 = inlined_call_operand.vmem [shape: f32[3,4,4], index: 2, kind: input, shape index: {}]
  %s3 = inlined_call_operand.vmem [shape: f32[3,4,4], index: 3, kind: input, shape index: {}]
  %s4 = inlined_call_operand.vmem [shape: f32[3,4], index: 4, kind: output, shape index: {0}]
  %s5 = inlined_call_operand.vmem [shape: f32[3,4], index: 5, kind: output, shape index: {1}]
  %s6 = inlined_call_operand.hbm [shape: f32[3,4,4], index: 6, kind: output, shape index: {2}]
  %s7 = inlined_call_operand.hbm [shape: f32[3,4,4], index: 7, kind: output, shape index: {3}]
  %s8 = inlined_call_operand.hbm [shape: f32[3,4,4], index: 8, kind: output, shape index: {4}]
  %s9 = inlined_call_operand.hbm [shape: f32[3,4,4], index: 9, kind: output, shape index: {5}]
  %10 = xla_tuple %s4, %s5, %s6, %s7, %s8, %s9
  $region1: #{custom-call.3} parent=0
    #allocation0 [shape = 'u8[4096]{0}', space=vmem, size = 0x1000, scoped, tag = 'operand span for operand 0']
    #allocation1 [shape = 'u8[4096]{0}', space=vmem, size = 0x1000, scoped, tag = 'packed  for operand 0']
    #allocation2 [shape = 'u8[4096]{0}', space=vmem, size = 0x1000, scoped, tag = 'operand span for operand 1']
    #allocation3 [shape = 'u8[4096]{0}', space=vmem, size = 0x1000, scoped, tag = 'packed  for operand 1']
    #allocation4 [shape = 'u8[4096]{0}', space=vmem, size = 0x1000, scoped, tag = 'operand span for operand 2']
    #allocation5 [shape = 'u8[4096]{0}', space=vmem, size = 0x1000, scoped, tag = 'packed  for operand 2']
    #allocation6 [shape = 'u8[4096]{0}', space=vmem, size = 0x1000, scoped, tag = 'operand span for operand 3']
    #allocation7 [shape = 'u8[4096]{0}', space=vmem, size = 0x1000, scoped, tag = 'packed  for operand 3']
    #allocation8 [shape = 'u8[4096]{0}', space=vmem, size = 0x1000, scoped, tag = 'operand span for operand 4']
    #allocation9 [shape = 'u8[4096]{0}', space=vmem, size = 0x1000, scoped, tag = 'packed  for operand 4']
    #allocation10 [shape = 'u8[4096]{0}', space=vmem, size = 0x1000, scoped, tag = 'operand span for operand 5']
    #allocation11 [shape = 'u8[4096]{0}', space=vmem, size = 0x1000, scoped, tag = 'packed  for operand 5']
    #allocation12 [shape = 'u8[4096]{0}', space=vmem, size = 0x1000, scoped, tag = 'operand span for operand 6']
    #allocation13 [shape = 'u8[4096]{0}', space=vmem, size = 0x1000, scoped, tag = 'packed  for operand 6']
    #allocation14 [shape = 's32[2]{0}', space=sflag, size = 0x8, scoped, tag = 'scoped memory for custom-call.3']
    #allocation15 [shape = 'u8[4096]{0}', space=vmem, size = 0x1000, scoped, tag = 'operand span for operand 7']
    #allocation16 [shape = 'u8[4096]{0}', space=vmem, size = 0x1000, scoped, tag = 'packed  for operand 7']
    #allocation17 [shape = 's32[2]{0}', space=sflag, size = 0x8, scoped, tag = 'scoped memory for custom-call.3']
    #allocation18 [shape = 'u8[4096]{0}', space=vmem, size = 0x1000, scoped, tag = 'operand span for operand 8']
    #allocation19 [shape = 'u8[4096]{0}', space=vmem, size = 0x1000, scoped, tag = 'packed  for operand 8']
    #allocation20 [shape = 'u8[4096]{0}', space=vmem, size = 0x1000, scoped, tag = 'operand span for operand 9']
    #allocation21 [shape = 'u8[4096]{0}', space=vmem, size = 0x1000, scoped, tag = 'packed  for operand 9']
    #allocation22 [shape = 's32[2]{0}', space=sflag, size = 0x8, scoped, tag = 'scoped memory for custom-call.3']
    %11 = vsyncpa [#allocation14], 0
    %s12 = scalar_lea.sflag [#allocation14], 1
    %13 = vsyncpa %s12, 0
    %14 = vsyncpa [#allocation17], 0
    %s15 = scalar_lea.sflag [#allocation17], 1
    %16 = vsyncpa %s15, 0
    %17 = vsyncpa [#allocation22], 0
    %s18 = scalar_lea.sflag [#allocation22], 1
    %19 = vsyncpa %s18, 0
    loop: start=0, step=1, limit=5
    $region2: #{custom-call.3} parent=1 // loop_pre_header
      _
    $region3: #{custom-call.3} parent=1 // loop_header
      %s21 = sphi 0, %s25
      %p22 = scmp.ge.s32.totalorder %s21, 5
      %s33 = sphi 0, %s35
      %s36 = sphi 0, %s33
      %s37 = sphi 0, %s36
      %s53 = sphi 0, %s37
      %s61 = sphi 0, %s63
      %s64 = sphi 0, %s61
      %s65 = sphi 0, %s64
      %s81 = sphi 0, %s65
    $region4: #{custom-call.3} parent=1 // loop_header_branch
      %24 = sbr.rel (%p22) target = $region8
    $region5: #{custom-call.3} parent=1 // loop_body
      %s26 = ssub.s32 %s21, 1
      %s27 = ssub.s32 %s21, 2
      %s28 = sadd.s32 %s21, 1
      %s29 = sshrl.u32 %s21, 3
      %s30 = sshrl.u32 %s28, 3
      %s31 = ssub.s32 %s29, %s30
      %p32 = scmp.eq.s32.totalorder %s31, 0
      %s34 = sadd.s32 %s33, 1
      %s35 = scalar_select %p32, %s33, %s34
      %p38 = pneg %p32
      %p39 = scmp.eq.s32.totalorder %s21, 2
      %p40 = por %p38, %p39
      %p41 = scmp.ne.s32.totalorder %s33, %s36
      %p42 = scmp.eq.s32.totalorder %s21, 0
      %p43 = por %p41, %p42
      %p44 = scmp.ne.s32.totalorder %s33, %s36
      %p45 = scmp.eq.s32.totalorder %s26, 2
      %p46 = por %p44, %p45
      %p47 = scmp.ne.s32.totalorder %s36, %s37
      %p48 = scmp.eq.s32.totalorder %s26, 0
      %p49 = por %p47, %p48
      %p50 = scmp.ne.s32.totalorder %s36, %s37
      %p51 = scmp.eq.s32.totalorder %s27, 2
      %p52 = por %p50, %p51
      %p54 = scmp.ne.s32.totalorder %s37, %s53
      %p55 = scmp.eq.s32.totalorder %s27, 0
      %p56 = por %p54, %p55
      %s57 = sshrl.u32 %s21, 3
      %s58 = sshrl.u32 %s28, 3
      %s59 = ssub.s32 %s57, %s58
      %p60 = scmp.eq.s32.totalorder %s59, 0
      %s62 = sadd.s32 %s61, 1
      %s63 = scalar_select %p60, %s61, %s62
      %p66 = pneg %p60
      %p67 = scmp.eq.s32.totalorder %s21, 2
      %p68 = por %p66, %p67
      %p69 = scmp.ne.s32.totalorder %s61, %s64
      %p70 = scmp.eq.s32.totalorder %s21, 0
      %p71 = por %p69, %p70
      %p72 = scmp.ne.s32.totalorder %s61, %s64
      %p73 = scmp.eq.s32.totalorder %s26, 2
      %p74 = por %p72, %p73
      %p75 = scmp.ne.s32.totalorder %s64, %s65
      %p76 = scmp.eq.s32.totalorder %s26, 0
      %p77 = por %p75, %p76
      %p78 = scmp.ne.s32.totalorder %s64, %s65
      %p79 = scmp.eq.s32.totalorder %s27, 2
      %p80 = por %p78, %p79
      %p82 = scmp.ne.s32.totalorder %s65, %s81
      %p83 = scmp.eq.s32.totalorder %s27, 0
      %p84 = por %p82, %p83
      %p85 = scmp.le.s32.totalorder 1, %s21
      %p86 = scmp.lt.s32.totalorder %s21, 4
      %p87 = pnand %p85, %p86
      %p88 = pneg %p87
      // Predicated region
      $region9: #{custom-call.3} parent=5 // pred_check
        _
      $region10: #{custom-call.3} parent=5 // pred_check_branch
        %90 = sbr.rel (%p87) target = $region12
      $region11: #{custom-call.3} parent=5 // pred_region
        %s91 = ssub.s32 %s21, 1
      $region12: #{custom-call.3} parent=5 // pred_fallthru
        _
      %p92 = scmp.lt.s32.totalorder %s21, 3
      // Predicated region
      $region13: #{custom-call.3} parent=5 // pred_check
        %p93 = pneg %p92
      $region14: #{custom-call.3} parent=5 // pred_check_branch
        %95 = sbr.rel (%p93) target = $region16
      $region15: #{custom-call.3} parent=5 // pred_region
        %s96 = sand.u32 %s21, 1
        %s97 = sand.u32 %s21, 1
        %s98 = smul.addr %s97, 4
        %s99 = scalar_lea.vmem [#allocation1], %s98
        %s100 = smul.addr %s21, 4
        %s101 = scalar_lea.vmem %s0, %s100
        // Predicated region
        $region17: #{custom-call.3} parent=15 // pred_check
          _
        $region18: #{custom-call.3} parent=15 // pred_check_branch
          %103 = sbr.rel (0) target = $region20
        $region19: #{custom-call.3} parent=15 // pred_region
          // Predicated region
          $region21: #{custom-call.3} parent=19 // pred_check
            _
          $region22: #{custom-call.3} parent=19 // pred_check_branch
            %105 = sbr.rel target = $region24
          $region23: #{custom-call.3} parent=19 // pred_region
            // Predicated region
            $region36: #{custom-call.3} parent=23 // pred_check
              _
            $region37: #{custom-call.3} parent=23 // pred_check_branch
              %120 = sbr.rel (0) target = $region39
            $region38: #{custom-call.3} parent=23 // pred_region
              loop: start=0, step=1, limit=1
              $region40: #{custom-call.3} parent=38 // loop_pre_header
                _
              $region41: #{custom-call.3} parent=38 // loop_header
                %s123 = sphi 0, %s127
                %p124 = scmp.ge.s32.totalorder %s123, 1
                %s128 = sphi %s101, %s101
                %s129 = sphi %s99, %s99
              $region42: #{custom-call.3} parent=38 // loop_header_branch
                %126 = sbr.rel (%p124) target = $region46
              $region43: #{custom-call.3} parent=38 // loop_body
                %v130 = vld [vmem:[%s128] sm:$0xf]
                %131 = vst [vmem:[%s129] sm:$0xf] %v130
              $region44: #{custom-call.3} parent=38 // loop_footer
                %s127 = sadd.s32 1, %s123
              $region45: #{custom-call.3} parent=38 // loop_footer_branch
                %122 = sbr.rel target = $region41
              $region46: #{custom-call.3} parent=38 // loop_exit
                _
            $region39: #{custom-call.3} parent=23 // pred_fallthru
              _
          $region24: #{custom-call.3} parent=19 // pred_fallthru
            _
          // Predicated region
          $region25: #{custom-call.3} parent=19 // pred_check
            _
          $region26: #{custom-call.3} parent=19 // pred_check_branch
            %107 = sbr.rel (0) target = $region28
          $region27: #{custom-call.3} parent=19 // pred_region
            loop: start=0, step=1, limit=1
            $region29: #{custom-call.3} parent=27 // loop_pre_header
              _
            $region30: #{custom-call.3} parent=27 // loop_header
              %s110 = sphi 0, %s114
              %p111 = scmp.ge.s32.totalorder %s110, 1
              %s115 = sphi %s101, %s101
              %s116 = sphi %s99, %s99
            $region31: #{custom-call.3} parent=27 // loop_header_branch
              %113 = sbr.rel (%p111) target = $region35
            $region32: #{custom-call.3} parent=27 // loop_body
              %v117 = vld [vmem:[%s115] sm:$0xf]
              %118 = vst [vmem:[%s116] sm:$0xf] %v117
            $region33: #{custom-call.3} parent=27 // loop_footer
              %s114 = sadd.s32 1, %s110
            $region34: #{custom-call.3} parent=27 // loop_footer_branch
              %109 = sbr.rel target = $region30
            $region35: #{custom-call.3} parent=27 // loop_exit
              _
          $region28: #{custom-call.3} parent=19 // pred_fallthru
            _
        $region20: #{custom-call.3} parent=15 // pred_fallthru
          _
        %132 = vnop
        %s133 = sand.u32 %s21, 1
        %s134 = sand.u32 %s21, 1
        %s135 = smul.addr %s134, 4
        %s136 = scalar_lea.vmem [#allocation3], %s135
        %s137 = smul.addr %s21, 4
        %s138 = scalar_lea.vmem %s1, %s137
        // Predicated region
        $region47: #{custom-call.3} parent=15 // pred_check
          _
        $region48: #{custom-call.3} parent=15 // pred_check_branch
          %140 = sbr.rel (0) target = $region50
        $region49: #{custom-call.3} parent=15 // pred_region
          // Predicated region
          $region51: #{custom-call.3} parent=49 // pred_check
            _
          $region52: #{custom-call.3} parent=49 // pred_check_branch
            %142 = sbr.rel target = $region54
          $region53: #{custom-call.3} parent=49 // pred_region
            // Predicated region
            $region66: #{custom-call.3} parent=53 // pred_check
              _
            $region67: #{custom-call.3} parent=53 // pred_check_branch
              %157 = sbr.rel (0) target = $region69
            $region68: #{custom-call.3} parent=53 // pred_region
              loop: start=0, step=1, limit=1
              $region70: #{custom-call.3} parent=68 // loop_pre_header
                _
              $region71: #{custom-call.3} parent=68 // loop_header
                %s160 = sphi 0, %s164
                %p161 = scmp.ge.s32.totalorder %s160, 1
                %s165 = sphi %s138, %s138
                %s166 = sphi %s136, %s136
              $region72: #{custom-call.3} parent=68 // loop_header_branch
                %163 = sbr.rel (%p161) target = $region76
              $region73: #{custom-call.3} parent=68 // loop_body
                %v167 = vld [vmem:[%s165] sm:$0xf]
                %168 = vst [vmem:[%s166] sm:$0xf] %v167
              $region74: #{custom-call.3} parent=68 // loop_footer
                %s164 = sadd.s32 1, %s160
              $region75: #{custom-call.3} parent=68 // loop_footer_branch
                %159 = sbr.rel target = $region71
              $region76: #{custom-call.3} parent=68 // loop_exit
                _
            $region69: #{custom-call.3} parent=53 // pred_fallthru
              _
          $region54: #{custom-call.3} parent=49 // pred_fallthru
            _
          // Predicated region
          $region55: #{custom-call.3} parent=49 // pred_check
            _
          $region56: #{custom-call.3} parent=49 // pred_check_branch
            %144 = sbr.rel (0) target = $region58
          $region57: #{custom-call.3} parent=49 // pred_region
            loop: start=0, step=1, limit=1
            $region59: #{custom-call.3} parent=57 // loop_pre_header
              _
            $region60: #{custom-call.3} parent=57 // loop_header
              %s147 = sphi 0, %s151
              %p148 = scmp.ge.s32.totalorder %s147, 1
              %s152 = sphi %s138, %s138
              %s153 = sphi %s136, %s136
            $region61: #{custom-call.3} parent=57 // loop_header_branch
              %150 = sbr.rel (%p148) target = $region65
            $region62: #{custom-call.3} parent=57 // loop_body
              %v154 = vld [vmem:[%s152] sm:$0xf]
              %155 = vst [vmem:[%s153] sm:$0xf] %v154
            $region63: #{custom-call.3} parent=57 // loop_footer
              %s151 = sadd.s32 1, %s147
            $region64: #{custom-call.3} parent=57 // loop_footer_branch
              %146 = sbr.rel target = $region60
            $region65: #{custom-call.3} parent=57 // loop_exit
              _
          $region58: #{custom-call.3} parent=49 // pred_fallthru
            _
        $region50: #{custom-call.3} parent=15 // pred_fallthru
          _
        %169 = vnop
        %s170 = sand.u32 %s21, 1
        %s171 = sand.u32 %s21, 1
        %s172 = smul.addr %s171, 4
        %s173 = scalar_lea.vmem [#allocation5], %s172
        %s174 = smul.addr %s21, 4
        %s175 = scalar_lea.vmem %s2, %s174
        // Predicated region
        $region77: #{custom-call.3} parent=15 // pred_check
          _
        $region78: #{custom-call.3} parent=15 // pred_check_branch
          %177 = sbr.rel (0) target = $region80
        $region79: #{custom-call.3} parent=15 // pred_region
          // Predicated region
          $region81: #{custom-call.3} parent=79 // pred_check
            _
          $region82: #{custom-call.3} parent=79 // pred_check_branch
            %179 = sbr.rel target = $region84
          $region83: #{custom-call.3} parent=79 // pred_region
            // Predicated region
            $region96: #{custom-call.3} parent=83 // pred_check
              _
            $region97: #{custom-call.3} parent=83 // pred_check_branch
              %194 = sbr.rel (0) target = $region99
            $region98: #{custom-call.3} parent=83 // pred_region
              loop: start=0, step=1, limit=1
              $region100: #{custom-call.3} parent=98 // loop_pre_header
                _
              $region101: #{custom-call.3} parent=98 // loop_header
                %s197 = sphi 0, %s201
                %p198 = scmp.ge.s32.totalorder %s197, 1
                %s202 = sphi %s175, %s175
                %s203 = sphi %s173, %s173
              $region102: #{custom-call.3} parent=98 // loop_header_branch
                %200 = sbr.rel (%p198) target = $region106
              $region103: #{custom-call.3} parent=98 // loop_body
                %v204 = vld [vmem:[%s202] sm:$0xf]
                %205 = vst [vmem:[%s203] sm:$0xf] %v204
              $region104: #{custom-call.3} parent=98 // loop_footer
                %s201 = sadd.s32 1, %s197
              $region105: #{custom-call.3} parent=98 // loop_footer_branch
                %196 = sbr.rel target = $region101
              $region106: #{custom-call.3} parent=98 // loop_exit
                _
            $region99: #{custom-call.3} parent=83 // pred_fallthru
              _
          $region84: #{custom-call.3} parent=79 // pred_fallthru
            _
          // Predicated region
          $region85: #{custom-call.3} parent=79 // pred_check
            _
          $region86: #{custom-call.3} parent=79 // pred_check_branch
            %181 = sbr.rel (0) target = $region88
          $region87: #{custom-call.3} parent=79 // pred_region
            loop: start=0, step=1, limit=1
            $region89: #{custom-call.3} parent=87 // loop_pre_header
              _
            $region90: #{custom-call.3} parent=87 // loop_header
              %s184 = sphi 0, %s188
              %p185 = scmp.ge.s32.totalorder %s184, 1
              %s189 = sphi %s175, %s175
              %s190 = sphi %s173, %s173
            $region91: #{custom-call.3} parent=87 // loop_header_branch
              %187 = sbr.rel (%p185) target = $region95
            $region92: #{custom-call.3} parent=87 // loop_body
              %v191 = vld [vmem:[%s189] sm:$0xf]
              %192 = vst [vmem:[%s190] sm:$0xf] %v191
            $region93: #{custom-call.3} parent=87 // loop_footer
              %s188 = sadd.s32 1, %s184
            $region94: #{custom-call.3} parent=87 // loop_footer_branch
              %183 = sbr.rel target = $region90
            $region95: #{custom-call.3} parent=87 // loop_exit
              _
          $region88: #{custom-call.3} parent=79 // pred_fallthru
            _
        $region80: #{custom-call.3} parent=15 // pred_fallthru
          _
        %206 = vnop
        %s207 = sand.u32 %s21, 1
        %s208 = sand.u32 %s21, 1
        %s209 = smul.addr %s208, 4
        %s210 = scalar_lea.vmem [#allocation7], %s209
        %s211 = smul.addr %s21, 4
        %s212 = scalar_lea.vmem %s3, %s211
        // Predicated region
        $region107: #{custom-call.3} parent=15 // pred_check
          _
        $region108: #{custom-call.3} parent=15 // pred_check_branch
          %214 = sbr.rel (0) target = $region110
        $region109: #{custom-call.3} parent=15 // pred_region
          // Predicated region
          $region111: #{custom-call.3} parent=109 // pred_check
            _
          $region112: #{custom-call.3} parent=109 // pred_check_branch
            %216 = sbr.rel target = $region114
          $region113: #{custom-call.3} parent=109 // pred_region
            // Predicated region
            $region126: #{custom-call.3} parent=113 // pred_check
              _
            $region127: #{custom-call.3} parent=113 // pred_check_branch
              %231 = sbr.rel (0) target = $region129
            $region128: #{custom-call.3} parent=113 // pred_region
              loop: start=0, step=1, limit=1
              $region130: #{custom-call.3} parent=128 // loop_pre_header
                _
              $region131: #{custom-call.3} parent=128 // loop_header
                %s234 = sphi 0, %s238
                %p235 = scmp.ge.s32.totalorder %s234, 1
                %s239 = sphi %s212, %s212
                %s240 = sphi %s210, %s210
              $region132: #{custom-call.3} parent=128 // loop_header_branch
                %237 = sbr.rel (%p235) target = $region136
              $region133: #{custom-call.3} parent=128 // loop_body
                %v241 = vld [vmem:[%s239] sm:$0xf]
                %242 = vst [vmem:[%s240] sm:$0xf] %v241
              $region134: #{custom-call.3} parent=128 // loop_footer
                %s238 = sadd.s32 1, %s234
              $region135: #{custom-call.3} parent=128 // loop_footer_branch
                %233 = sbr.rel target = $region131
              $region136: #{custom-call.3} parent=128 // loop_exit
                _
            $region129: #{custom-call.3} parent=113 // pred_fallthru
              _
          $region114: #{custom-call.3} parent=109 // pred_fallthru
            _
          // Predicated region
          $region115: #{custom-call.3} parent=109 // pred_check
            _
          $region116: #{custom-call.3} parent=109 // pred_check_branch
            %218 = sbr.rel (0) target = $region118
          $region117: #{custom-call.3} parent=109 // pred_region
            loop: start=0, step=1, limit=1
            $region119: #{custom-call.3} parent=117 // loop_pre_header
              _
            $region120: #{custom-call.3} parent=117 // loop_header
              %s221 = sphi 0, %s225
              %p222 = scmp.ge.s32.totalorder %s221, 1
              %s226 = sphi %s212, %s212
              %s227 = sphi %s210, %s210
            $region121: #{custom-call.3} parent=117 // loop_header_branch
              %224 = sbr.rel (%p222) target = $region125
            $region122: #{custom-call.3} parent=117 // loop_body
              %v228 = vld [vmem:[%s226] sm:$0xf]
              %229 = vst [vmem:[%s227] sm:$0xf] %v228
            $region123: #{custom-call.3} parent=117 // loop_footer
              %s225 = sadd.s32 1, %s221
            $region124: #{custom-call.3} parent=117 // loop_footer_branch
              %220 = sbr.rel target = $region120
            $region125: #{custom-call.3} parent=117 // loop_exit
              _
          $region118: #{custom-call.3} parent=109 // pred_fallthru
            _
        $region110: #{custom-call.3} parent=15 // pred_fallthru
          _
        %243 = vnop
      $region16: #{custom-call.3} parent=5 // pred_fallthru
        _
      %p244 = scmp.le.s32.totalorder 1, %s21
      %p245 = scmp.lt.s32.totalorder %s21, 4
      %p246 = pnand %p244, %p245
      %p247 = pneg %p246
      // Predicated region
      $region137: #{custom-call.3} parent=5 // pred_check
        _
      $region138: #{custom-call.3} parent=5 // pred_check_branch
        %249 = sbr.rel (%p246) target = $region140
      $region139: #{custom-call.3} parent=5 // pred_region
        #allocation23 [shape = 'f32[4,4]{1,0}', space=vmem, size = 0x1000, scoped, tag = 'a top-left matrix']
        #allocation24 [shape = 'f32[4,4]{1,0}', space=vmem, size = 0x1000, scoped, tag = 'a top-right matrix']
        #allocation25 [shape = 'f32[4,4]{1,0}', space=vmem, size = 0x1000, scoped, tag = 'a bottom-left matrix']
        #allocation26 [shape = 'f32[4,4]{1,0}', space=vmem, size = 0x1000, scoped, tag = 'a bottom-right matrix']
        %s250 = ssub.s32 %s21, 1
        %s251 = sand.u32 %s26, 1
        %s252 = sand.u32 %s26, 1
        %s253 = smul.addr %s252, 4
        %s254 = scalar_lea.vmem [#allocation1], %s253
        %s255 = sand.u32 %s26, 1
        %s256 = sand.u32 %s26, 1
        %s257 = smul.addr %s256, 4
        %s258 = scalar_lea.vmem [#allocation3], %s257
        %s259 = sand.u32 %s26, 1
        %s260 = sand.u32 %s26, 1
        %s261 = smul.addr %s260, 4
        %s262 = scalar_lea.vmem [#allocation5], %s261
        %s263 = sand.u32 %s26, 1
        %s264 = sand.u32 %s26, 1
        %s265 = smul.addr %s264, 4
        %s266 = scalar_lea.vmem [#allocation7], %s265
        %s267 = sand.u32 %s26, 1
        %s268 = sand.u32 %s26, 1
        %s269 = smul.addr %s268, 4
        %s270 = scalar_lea.vmem [#allocation1], %s269
        %s271 = sand.u32 %s26, 1
        %s272 = sand.u32 %s26, 1
        %s273 = smul.addr %s272, 4
        %s274 = scalar_lea.vmem [#allocation3], %s273
        %s275 = sand.u32 %s26, 1
        %s276 = sand.u32 %s26, 1
        %s277 = smul.addr %s276, 4
        %s278 = scalar_lea.vmem [#allocation5], %s277
        %s279 = sand.u32 %s26, 1
        %s280 = sand.u32 %s26, 1
        %s281 = smul.addr %s280, 4
        %s282 = scalar_lea.vmem [#allocation7], %s281
        %p283 = pneg %p49
        %p284 = pneg %p46
        %s285 = sand.u32 %s36, 1
        %s286 = sand.u32 %s36, 1
        %s287 = smul.addr %s286, 4
        %s288 = scalar_lea.vmem [#allocation9], %s287
        %p289 = pneg %p77
        %p290 = pneg %p74
        %s291 = sand.u32 %s64, 1
        %s292 = sand.u32 %s64, 1
        %s293 = smul.addr %s292, 4
        %s294 = scalar_lea.vmem [#allocation11], %s293
        %s295 = sand.u32 %s26, 1
        %s296 = scalar_lea.sflag [#allocation14], %s295
        %s297 = sand.u32 %s26, 1
        %s298 = smul.addr %s297, 4
        %s299 = scalar_lea.vmem [#allocation13], %s298
        %s300 = sand.u32 %s26, 1
        %s301 = scalar_lea.sflag [#allocation17], %s300
        %s302 = sand.u32 %s26, 1
        %s303 = smul.addr %s302, 4
        %s304 = scalar_lea.vmem [#allocation16], %s303
        %s305 = sand.u32 %s26, 1
        %s306 = scalar_lea.sflag [#allocation17], %s305
        %s307 = sand.u32 %s26, 1
        %s308 = smul.addr %s307, 4
        %s309 = scalar_lea.vmem [#allocation19], %s308
        %s310 = sand.u32 %s26, 1
        %s311 = scalar_lea.sflag [#allocation22], %s310
        %s312 = sand.u32 %s26, 1
        %s313 = smul.addr %s312, 4
        %s314 = scalar_lea.vmem [#allocation21], %s313
        %s316 = sshllo.u32 0, 4
        %v317 = vld [vmem:[%s270] sm:%s316]
        %318 = vst [vmem:[#allocation0] sm:%s316] %v317
        %s320 = sshllo.u32 0, 4
        %v321 = vld [vmem:[%s274] sm:%s320]
        %322 = vst [vmem:[#allocation2] sm:%s320] %v321
        %s324 = sshllo.u32 0, 4
        %v325 = vld [vmem:[%s278] sm:%s324]
        %326 = vst [vmem:[#allocation4] sm:%s324] %v325
        %s328 = sshllo.u32 0, 4
        %v329 = vld [vmem:[%s282] sm:%s328]
        %330 = vst [vmem:[#allocation6] sm:%s328] %v329
        %s331 = sshrl.u32 %s26, 3
        %s332 = sshrl.u32 %s26, 3
        %s333 = smov [#allocation23]
        %v334 = vld [vmem:[#allocation0] sm:$0xff]
        %335 = vst [vmem:[%s333] sm:$0xff] %v334
        %s336 = smov [#allocation24]
        %v337 = vld [vmem:[#allocation2] sm:$0xff]
        %338 = vst [vmem:[%s336] sm:$0xff] %v337
        %s339 = smov [#allocation25]
        %v340 = vld [vmem:[#allocation4] sm:$0xff]
        %341 = vst [vmem:[%s339] sm:$0xff] %v340
        %s342 = smov [#allocation26]
        %v343 = vld [vmem:[#allocation6] sm:$0xff]
        %344 = vst [vmem:[%s342] sm:$0xff] %v343
        %345 = vst [vmem:[#allocation12] sm:$0xff] 0.0
        %346 = vst [vmem:[#allocation15] sm:$0xff] 0.0
        %347 = vst [vmem:[#allocation18] sm:$0xff] 0.0
        %348 = vst [vmem:[#allocation20] sm:$0xff] 0.0
        %s349 = smov [#allocation12]
        %v350 = vlaneseq
        %v351 = vand.u32 %v350, 127
        %v352 = vmov %v351
        %v353 = vlaneseq
        %v354 = vshrl.u32 %v353, 7
        %v355 = vmov %v354
        %v356 = vld [vmem:[%s349] sm:$0xf]
        %vm359 = vcmp.eq.s32.totalorder %v355, %v352
        %v360 = vsel %vm359, 1.0, %v356
        %361 = vst [vmem:[%s349] sm:$0xf] %v360
        %s362 = smov [#allocation20]
        %v363 = vlaneseq
        %v364 = vand.u32 %v363, 127
        %v365 = vmov %v364
        %v366 = vlaneseq
        %v367 = vshrl.u32 %v366, 7
        %v368 = vmov %v367
        %v369 = vld [vmem:[%s362] sm:$0xf]
        %vm372 = vcmp.eq.s32.totalorder %v368, %v365
        %v373 = vsel %vm372, 1.0, %v369
        %374 = vst [vmem:[%s362] sm:$0xf] %v373
        // While loop
        $region141: #{custom-call.3} parent=139 // loop_pre_header
          _
        $region142: #{custom-call.3} parent=139 // loop_header
          %s376 = sphi 0, %s918
          %v377 = vlaneseq
          %v378 = vand.u32 %v377, 127
          %v379 = vmov %v378
          %v380 = vlaneseq
          %v381 = vshrl.u32 %v380, 7
          %v382 = vmov %v381
          %s383 = smov [#allocation23]
          %v384 = vlaneseq
          %v385 = vand.u32 %v384, 127
          %vm386 = vcmp.ge.s32.totalorder %v385, 0
          %vm387 = vcmp.lt.s32.totalorder %v385, 4
          %vm388 = vmand %vm386, %vm387
          %v389 = vld [vmem:[%s383] sm:$0xf]
          %v390 = vsel %vm388, %v389, 0.0
          %v391 = vmul.f32 %v390, %v390
          %vm394 = vcmp.eq.s32.totalorder %v382, %v379
          %v395 = vsel %vm394, 0.0, %v391
          %v396 = vlaneseq
          %v397 = vand.u32 %v396, 127
          %v398 = vmov %v397
          %v399 = vlaneseq
          %v400 = vshrl.u32 %v399, 7
          %v401 = vmov %v400
          %s402 = smov [#allocation24]
          %v403 = vlaneseq
          %v404 = vand.u32 %v403, 127
          %vm405 = vcmp.ge.s32.totalorder %v404, 0
          %vm406 = vcmp.lt.s32.totalorder %v404, 4
          %vm407 = vmand %vm405, %vm406
          %v408 = vld [vmem:[%s402] sm:$0xf]
          %v409 = vsel %vm407, %v408, 0.0
          %v410 = vmul.f32 %v409, %v409
          %v411 = vadd.f32 %v395, %v410
          %v412 = vadd.f32 %v391, %v410
          %v413 = vlaneseq
          %v414 = vand.u32 %v413, 127
          %v415 = vmov %v414
          %v416 = vlaneseq
          %v417 = vshrl.u32 %v416, 7
          %v418 = vmov %v417
          %s419 = smov [#allocation25]
          %v420 = vlaneseq
          %v421 = vand.u32 %v420, 127
          %vm422 = vcmp.ge.s32.totalorder %v421, 0
          %vm423 = vcmp.lt.s32.totalorder %v421, 4
          %vm424 = vmand %vm422, %vm423
          %v425 = vld [vmem:[%s419] sm:$0xf]
          %v426 = vsel %vm424, %v425, 0.0
          %v427 = vmul.f32 %v426, %v426
          %v428 = vadd.f32 %v411, %v427
          %v429 = vadd.f32 %v412, %v427
          %v430 = vlaneseq
          %v431 = vand.u32 %v430, 127
          %v432 = vmov %v431
          %v433 = vlaneseq
          %v434 = vshrl.u32 %v433, 7
          %v435 = vmov %v434
          %s436 = smov [#allocation26]
          %v437 = vlaneseq
          %v438 = vand.u32 %v437, 127
          %vm439 = vcmp.ge.s32.totalorder %v438, 0
          %vm440 = vcmp.lt.s32.totalorder %v438, 4
          %vm441 = vmand %vm439, %vm440
          %v442 = vld [vmem:[%s436] sm:$0xf]
          %v443 = vsel %vm441, %v442, 0.0
          %v444 = vmul.f32 %v443, %v443
          %vm447 = vcmp.eq.s32.totalorder %v435, %v432
          %v448 = vsel %vm447, 0.0, %v444
          %v449 = vadd.f32 %v428, %v448
          %v450 = vadd.f32 %v429, %v444
          %451 = vadd.xlane.f32.xlu0 %v450
          %v452 = vpop.xlane.xlu0 %451
          %v453 = vrot.slane %v452, 4
          %v454 = vadd.f32 %v452, %v453
          %v455 = vrot.slane %v454, 2
          %v456 = vadd.f32 %v454, %v455
          %v457 = vrot.slane %v456, 1
          %v458 = vadd.f32 %v456, %v457
          %459 = vadd.xlane.f32.xlu0 %v449
          %v460 = vpop.xlane.xlu0 %459
          %v461 = vrot.slane %v460, 4
          %v462 = vadd.f32 %v460, %v461
          %v463 = vrot.slane %v462, 2
          %v464 = vadd.f32 %v462, %v463
          %v465 = vrot.slane %v464, 1
          %v466 = vadd.f32 %v464, %v465
          %s467 = vtos %v466
          %s468 = vtos %v458
          %s469 = smul.f32 1e-10, %s468
          %p470 = scmp.le.f32.partialorder %s467, %s469
          %p471 = scmp.ge.s32.totalorder %s376, 15
          %p472 = por %p470, %p471
        $region143: #{custom-call.3} parent=139 // loop_header_branch
          %920 = sbr.rel (%p472) target = $region147
        $region144: #{custom-call.3} parent=139 // loop_body
          loop: start=0, step=1, limit=7
          $region148: #{custom-call.3} parent=144 // loop_pre_header
            _
          $region149: #{custom-call.3} parent=144 // loop_header
            %s474 = sphi 0, %s478
            %p475 = scmp.ge.s32.totalorder %s474, 7
          $region150: #{custom-call.3} parent=144 // loop_header_branch
            %477 = sbr.rel (%p475) target = $region154
          $region151: #{custom-call.3} parent=144 // loop_body
            #allocation27 [shape = 'f32[1024]{0}', space=vmem, size = 0x1000, scoped, tag = 'a_tl_diag vmem']
            #allocation28 [shape = 'f32[1024]{0}', space=vmem, size = 0x1000, scoped, tag = 'a_tr_diag vmem']
            #allocation29 [shape = 'f32[1024]{0}', space=vmem, size = 0x1000, scoped, tag = 'a_br_diag vmem']
            #allocation30 [shape = 'f32[1024]{0}', space=vmem, size = 0x1000, scoped, tag = 'rt1 vmem']
            #allocation31 [shape = 'f32[1024]{0}', space=vmem, size = 0x1000, scoped, tag = 'rt2 vmem']
            #allocation32 [shape = 'f32[1024]{0}', space=vmem, size = 0x1000, scoped, tag = 'c vmem']
            #allocation33 [shape = 'f32[1024]{0}', space=vmem, size = 0x1000, scoped, tag = 's vmem']
            #allocation34 [shape = 'f32[4096]{0}', space=vmem, size = 0x4000, scoped, tag = 'c broadcast']
            #allocation35 [shape = 'f32[4096]{0}', space=vmem, size = 0x4000, scoped, tag = 's broadcast']
            %s479 = smov [#allocation23]
            %s480 = smov [#allocation27]
            %v481 = vlaneseq
            %v482 = vand.u32 %v481, 127
            %v483 = vmov %v482
            %v484 = vlaneseq
            %v485 = vshrl.u32 %v484, 7
            %v486 = vmov %v485
            %v487 = vld [vmem:[%s479] sm:$0xf]
            %vm490 = vcmp.eq.s32.totalorder %v486, %v483
            %v491 = vsel %vm490, %v487, 0.0
            %v492 = vrot.slane %v491, 4
            %v493 = vadd.f32 %v491, %v492
            %v494 = vrot.slane %v493, 2
            %v495 = vadd.f32 %v493, %v494
            %v496 = vrot.slane %v495, 1
            %v497 = vadd.f32 %v495, %v496
            %498 = vst [vmem:[%s480] sm:$0x1] %v497
            %s499 = smov [#allocation24]
            %s500 = smov [#allocation28]
            %v501 = vlaneseq
            %v502 = vand.u32 %v501, 127
            %v503 = vmov %v502
            %v504 = vlaneseq
            %v505 = vshrl.u32 %v504, 7
            %v506 = vmov %v505
            %v507 = vld [vmem:[%s499] sm:$0xf]
            %vm510 = vcmp.eq.s32.totalorder %v506, %v503
            %v511 = vsel %vm510, %v507, 0.0
            %v512 = vrot.slane %v511, 4
            %v513 = vadd.f32 %v511, %v512
            %v514 = vrot.slane %v513, 2
            %v515 = vadd.f32 %v513, %v514
            %v516 = vrot.slane %v515, 1
            %v517 = vadd.f32 %v515, %v516
            %518 = vst [vmem:[%s500] sm:$0x1] %v517
            %s519 = smov [#allocation26]
            %s520 = smov [#allocation29]
            %v521 = vlaneseq
            %v522 = vand.u32 %v521, 127
            %v523 = vmov %v522
            %v524 = vlaneseq
            %v525 = vshrl.u32 %v524, 7
            %v526 = vmov %v525
            %v527 = vld [vmem:[%s519] sm:$0xf]
            %vm530 = vcmp.eq.s32.totalorder %v526, %v523
            %v531 = vsel %vm530, %v527, 0.0
            %v532 = vrot.slane %v531, 4
            %v533 = vadd.f32 %v531, %v532
            %v534 = vrot.slane %v533, 2
            %v535 = vadd.f32 %v533, %v534
            %v536 = vrot.slane %v535, 1
            %v537 = vadd.f32 %v535, %v536
            %538 = vst [vmem:[%s520] sm:$0x1] %v537
            %s539 = smov [#allocation32]
            %s540 = smov [#allocation33]
            %s541 = smov [#allocation27]
            %v542 = vld [vmem:[%s541] sm:$0xff]
            %s543 = smov [#allocation28]
            %v544 = vld [vmem:[%s543] sm:$0xff]
            %s545 = smov [#allocation29]
            %v546 = vld [vmem:[%s545] sm:$0xff]
            %v547 = vsub.f32 %v546, %v542
            %v548 = vmul.f32 2.0, %v544
            %v549 = vrcp.pop %v548
            %v550 = vmul.f32 %v547, %v549
            %vm551 = vcmp.ge.f32.partialorder %v550, 0.0
            %v552 = vmul.f32 %v550, %v550
            %v553 = vadd.f32 1.0, %v552
            %v554 = vrsqrt.pop %v553
            %v555 = vmul.f32 %v553, %v554
            %vm556 = vcmp.eq.f32.partialorder %v553, inf
            %v557 = vsel %vm556, %v553, %v555
            %vm558 = vcmp.eq.f32.partialorder %v553, 0.0
            %v559 = vand.u32 %v553, 2147483648
            %v560 = vsel %vm558, %v559, %v557
            %v561 = vxor.u32 %v560, 2147483648
            %v562 = vsel %vm551, %v560, %v561
            %v563 = vadd.f32 %v550, %v562
            %v564 = vrcp.pop %v563
            %v565 = vand.u32 2147483647, %v542
            %v566 = vand.u32 2147483647, %v544
            %v567 = vand.u32 2147483647, %v546
            %v568 = vmin.f32 %v565, %v567
            %v569 = vmul.f32 1.1920929e-08, %v568
            %vm570 = vcmp.le.f32.partialorder %v566, %v569
            %v571 = vsel %vm570, 0.0, %v564
            %v572 = vmul.f32 %v571, %v571
            %v573 = vadd.f32 1.0, %v572
            %v574 = vrsqrt.pop %v573
            %v575 = vmul.f32 %v571, %v574
            %v576 = vmul.f32 %v571, %v544
            %v577 = vsub.f32 %v542, %v576
            %v578 = vmul.f32 %v571, %v544
            %v579 = vadd.f32 %v546, %v578
            %s580 = smov [#allocation30]
            %581 = vst [vmem:[%s580] sm:$0xff] %v577
            %s582 = smov [#allocation31]
            %583 = vst [vmem:[%s582] sm:$0xff] %v579
            %s584 = smov %s539
            %585 = vst [vmem:[%s584] sm:$0xff] %v574
            %s586 = smov %s540
            %587 = vst [vmem:[%s586] sm:$0xff] %v575
            %s588 = smov [#allocation32]
            %v589 = vld [vmem:[%s588] ss:$0 sm:$0xff]
            %v590 = vlaneseq
            %v591 = vand.u32 %v590, 127
            %v592 = vmov %v591
            %v593 = vlaneseq
            %v594 = vshrl.u32 %v593, 7
            %v595 = vmov %v594
            %vm597 = vcmp.eq.s32.totalorder %v595, %v592
            %v598 = vsel %vm597, %v589, 0.0
            %599 = vadd.xlane.f32.xlu0 %v598
            %v600 = vpop.xlane.xlu0 %599
            %s601 = smov [#allocation34]
            %602 = vst [vmem:[%s601] sm:$0xff] %v600
            %s603 = smov [#allocation33]
            %v604 = vld [vmem:[%s603] ss:$0 sm:$0xff]
            %v605 = vlaneseq
            %v606 = vand.u32 %v605, 127
            %v607 = vmov %v606
            %v608 = vlaneseq
            %v609 = vshrl.u32 %v608, 7
            %v610 = vmov %v609
            %vm612 = vcmp.eq.s32.totalorder %v610, %v607
            %v613 = vsel %vm612, %v604, 0.0
            %614 = vadd.xlane.f32.xlu0 %v613
            %v615 = vpop.xlane.xlu0 %614
            %s616 = smov [#allocation35]
            %617 = vst [vmem:[%s616] sm:$0xff] %v615
            %s618 = smov [#allocation34]
            %v619 = vld [vmem:[%s618] sm:$0xff]
            %s620 = smov [#allocation35]
            %v621 = vld [vmem:[%s620] sm:$0xff]
            %s622 = smov [#allocation23]
            %s623 = smov [#allocation24]
            %s624 = smov [#allocation25]
            %s625 = smov [#allocation26]
            %v626 = vld [vmem:[%s622] sm:$0xf]
            %v627 = vld [vmem:[%s623] sm:$0xf]
            %v628 = vld [vmem:[%s624] sm:$0xf]
            %v629 = vld [vmem:[%s625] sm:$0xf]
            %v630 = vmul.f32 %v619, %v626
            %v631 = vmul.f32 %v621, %v628
            %v632 = vsub.f32 %v630, %v631
            %v633 = vmul.f32 %v619, %v627
            %v634 = vmul.f32 %v621, %v629
            %v635 = vsub.f32 %v633, %v634
            %v636 = vmul.f32 %v621, %v626
            %v637 = vmul.f32 %v619, %v628
            %v638 = vadd.f32 %v636, %v637
            %v639 = vmul.f32 %v621, %v627
            %v640 = vmul.f32 %v619, %v629
            %v641 = vadd.f32 %v639, %v640
            %642 = vst [vmem:[%s622] sm:$0xf] %v632
            %643 = vst [vmem:[%s623] sm:$0xf] %v635
            %644 = vst [vmem:[%s624] sm:$0xf] %v638
            %645 = vst [vmem:[%s625] sm:$0xf] %v641
            %s646 = smov [#allocation32]
            %v647 = vld [vmem:[%s646] ss:$0 sm:$0xff]
            %s648 = smov [#allocation33]
            %v649 = vld [vmem:[%s648] ss:$0 sm:$0xff]
            %s650 = smov [#allocation23]
            %s651 = smov [#allocation24]
            %s652 = smov [#allocation25]
            %s653 = smov [#allocation26]
            %v654 = vld [vmem:[%s650] sm:$0xf]
            %v655 = vld [vmem:[%s651] sm:$0xf]
            %v656 = vld [vmem:[%s652] sm:$0xf]
            %v657 = vld [vmem:[%s653] sm:$0xf]
            %v658 = vmul.f32 %v647, %v654
            %v659 = vmul.f32 %v649, %v655
            %v660 = vsub.f32 %v658, %v659
            %v661 = vmul.f32 %v649, %v654
            %v662 = vmul.f32 %v647, %v655
            %v663 = vadd.f32 %v661, %v662
            %v664 = vmul.f32 %v647, %v656
            %v665 = vmul.f32 %v649, %v657
            %v666 = vsub.f32 %v664, %v665
            %v667 = vmul.f32 %v649, %v656
            %v668 = vmul.f32 %v647, %v657
            %v669 = vadd.f32 %v667, %v668
            %670 = vst [vmem:[%s650] sm:$0xf] %v660
            %671 = vst [vmem:[%s651] sm:$0xf] %v663
            %672 = vst [vmem:[%s652] sm:$0xf] %v666
            %673 = vst [vmem:[%s653] sm:$0xf] %v669
            %s674 = smov [#allocation23]
            %s675 = smov [#allocation30]
            %v676 = vlaneseq
            %v677 = vand.u32 %v676, 127
            %v678 = vmov %v677
            %v679 = vlaneseq
            %v680 = vshrl.u32 %v679, 7
            %v681 = vmov %v680
            %v682 = vld [vmem:[%s675] ss:$0 sm:$0xff]
            %v683 = vld [vmem:[%s674] sm:$0xf]
            %vm686 = vcmp.eq.s32.totalorder %v681, %v678
            %v687 = vsel %vm686, %v682, %v683
            %688 = vst [vmem:[%s674] sm:$0xf] %v687
            %s689 = smov [#allocation24]
            %v690 = vlaneseq
            %v691 = vand.u32 %v690, 127
            %v692 = vmov %v691
            %v693 = vlaneseq
            %v694 = vshrl.u32 %v693, 7
            %v695 = vmov %v694
            %v696 = vld [vmem:[%s689] sm:$0xf]
            %vm699 = vcmp.eq.s32.totalorder %v695, %v692
            %v700 = vsel %vm699, 0.0, %v696
            %701 = vst [vmem:[%s689] sm:$0xf] %v700
            %s702 = smov [#allocation25]
            %v703 = vlaneseq
            %v704 = vand.u32 %v703, 127
            %v705 = vmov %v704
            %v706 = vlaneseq
            %v707 = vshrl.u32 %v706, 7
            %v708 = vmov %v707
            %v709 = vld [vmem:[%s702] sm:$0xf]
            %vm712 = vcmp.eq.s32.totalorder %v708, %v705
            %v713 = vsel %vm712, 0.0, %v709
            %714 = vst [vmem:[%s702] sm:$0xf] %v713
            %s715 = smov [#allocation26]
            %s716 = smov [#allocation31]
            %v717 = vlaneseq
            %v718 = vand.u32 %v717, 127
            %v719 = vmov %v718
            %v720 = vlaneseq
            %v721 = vshrl.u32 %v720, 7
            %v722 = vmov %v721
            %v723 = vld [vmem:[%s716] ss:$0 sm:$0xff]
            %v724 = vld [vmem:[%s715] sm:$0xf]
            %vm727 = vcmp.eq.s32.totalorder %v722, %v719
            %v728 = vsel %vm727, %v723, %v724
            %729 = vst [vmem:[%s715] sm:$0xf] %v728
            %s730 = smov [#allocation23]
            %s731 = smov [#allocation24]
            %v732 = vld [vmem:[%s731] sm:$0xf]
            %733 = vrot.lane.b32.xlu0 %v732, 1
            %v734 = vpop.permute.xlu0 %733
            %v735 = vld [vmem:[%s730] sm:$0xf]
            %v736 = vld [vmem:[%s730] sm:$0xf]
            %737 = vrot.lane.b32.xlu0 %v736, 1
            %v738 = vpop.permute.xlu0 %737
            %v739 = vlaneseq
            %v740 = vand.u32 %v739, 127
            %vm741 = vcmp.eq.s32.totalorder %v740, 0
            %v742 = vsel %vm741, %v736, %v738
            %v743 = vlaneseq
            %v744 = vand.u32 %v743, 127
            %vm745 = vcmp.eq.s32.totalorder %v744, 1
            %v746 = vsel %vm745, %v734, %v742
            %v747 = vlaneseq
            %v748 = vand.u32 %v747, 127
            %vm749 = vcmp.ge.s32.totalorder %v748, 0
            %vm750 = vcmp.lt.s32.totalorder %v748, 4
            %vm751 = vmand %vm749, %vm750
            %v752 = vsel %vm751, %v746, 0.0
            %v753 = vld [vmem:[%s731] sm:$0xf]
            %754 = vrot.lane.b32.xlu0 %v753, 127
            %v755 = vpop.permute.xlu0 %754
            %v756 = vlaneseq
            %v757 = vand.u32 %v756, 127
            %vm758 = vcmp.eq.s32.totalorder %v757, 3
            %v759 = vsel %vm758, %v735, %v755
            %760 = vst [vmem:[%s730] sm:$0xf] %v752
            %761 = vst [vmem:[%s731] sm:$0xf] %v759
            %s762 = smov [#allocation25]
            %s763 = smov [#allocation26]
            %v764 = vld [vmem:[%s763] sm:$0xf]
            %765 = vrot.lane.b32.xlu0 %v764, 1
            %v766 = vpop.permute.xlu0 %765
            %v767 = vld [vmem:[%s762] sm:$0xf]
            %v768 = vld [vmem:[%s762] sm:$0xf]
            %769 = vrot.lane.b32.xlu0 %v768, 1
            %v770 = vpop.permute.xlu0 %769
            %v771 = vlaneseq
            %v772 = vand.u32 %v771, 127
            %vm773 = vcmp.eq.s32.totalorder %v772, 0
            %v774 = vsel %vm773, %v768, %v770
            %v775 = vlaneseq
            %v776 = vand.u32 %v775, 127
            %vm777 = vcmp.eq.s32.totalorder %v776, 1
            %v778 = vsel %vm777, %v766, %v774
            %v779 = vlaneseq
            %v780 = vand.u32 %v779, 127
            %vm781 = vcmp.ge.s32.totalorder %v780, 0
            %vm782 = vcmp.lt.s32.totalorder %v780, 4
            %vm783 = vmand %vm781, %vm782
            %v784 = vsel %vm783, %v778, 0.0
            %v785 = vld [vmem:[%s763] sm:$0xf]
            %786 = vrot.lane.b32.xlu0 %v785, 127
            %v787 = vpop.permute.xlu0 %786
            %v788 = vlaneseq
            %v789 = vand.u32 %v788, 127
            %vm790 = vcmp.eq.s32.totalorder %v789, 3
            %v791 = vsel %vm790, %v767, %v787
            %792 = vst [vmem:[%s762] sm:$0xf] %v784
            %793 = vst [vmem:[%s763] sm:$0xf] %v791
            %s794 = smov [#allocation23]
            %s795 = smov [#allocation25]
            %v796 = vld [vmem:[%s794] ss:$0 sm:$0xff]
            %s798 = scalar_lea.vmem %s794, 4294967295
            %v799 = vld [vmem:[%s798] sm:$0xe]
            %v800 = vlaneseq
            %v801 = vshrl.u32 %v800, 7
            %vm802 = vcmp.eq.s32.totalorder %v801, 0
            %v803 = vsel %vm802, %v796, %v799
            %s804 = scalar_lea.vmem %s794, 3
            %v805 = vld [vmem:[%s804] ss:$0 sm:$0xff]
            %806 = vst [vmem:[%s794] sm:$0xf] %v803
            %v807 = vld [vmem:[%s795] ss:$0 sm:$0xff]
            %s808 = scalar_lea.vmem %s794, 1
            %809 = vst [vmem:[%s808] sm:$0x1] %v807
            %s810 = scalar_lea.vmem %s795, 1
            %v811 = vld [vmem:[%s810] sm:$0x7]
            %v812 = vlaneseq
            %v813 = vshrl.u32 %v812, 7
            %vm814 = vcmp.eq.s32.totalorder %v813, 3
            %v815 = vsel %vm814, %v805, %v811
            %v816 = vld [vmem:[%s795] ss:$0 sm:$0xff]
            %817 = vst [vmem:[%s795] sm:$0xf] %v815
            %s818 = smov [#allocation24]
            %s819 = smov [#allocation26]
            %v820 = vld [vmem:[%s818] ss:$0 sm:$0xff]
            %s822 = scalar_lea.vmem %s818, 4294967295
            %v823 = vld [vmem:[%s822] sm:$0xe]
            %v824 = vlaneseq
            %v825 = vshrl.u32 %v824, 7
            %vm826 = vcmp.eq.s32.totalorder %v825, 0
            %v827 = vsel %vm826, %v820, %v823
            %s828 = scalar_lea.vmem %s818, 3
            %v829 = vld [vmem:[%s828] ss:$0 sm:$0xff]
            %830 = vst [vmem:[%s818] sm:$0xf] %v827
            %v831 = vld [vmem:[%s819] ss:$0 sm:$0xff]
            %s832 = scalar_lea.vmem %s818, 1
            %833 = vst [vmem:[%s832] sm:$0x1] %v831
            %s834 = scalar_lea.vmem %s819, 1
            %v835 = vld [vmem:[%s834] sm:$0x7]
            %v836 = vlaneseq
            %v837 = vshrl.u32 %v836, 7
            %vm838 = vcmp.eq.s32.totalorder %v837, 3
            %v839 = vsel %vm838, %v829, %v835
            %v840 = vld [vmem:[%s819] ss:$0 sm:$0xff]
            %841 = vst [vmem:[%s819] sm:$0xf] %v839
            %s842 = smov [#allocation34]
            %v843 = vld [vmem:[%s842] sm:$0xff]
            %s844 = smov [#allocation35]
            %v845 = vld [vmem:[%s844] sm:$0xff]
            %s846 = smov [#allocation12]
            %s847 = smov [#allocation15]
            %s848 = smov [#allocation18]
            %s849 = smov [#allocation20]
            %v850 = vld [vmem:[%s846] sm:$0xf]
            %v851 = vld [vmem:[%s847] sm:$0xf]
            %v852 = vld [vmem:[%s848] sm:$0xf]
            %v853 = vld [vmem:[%s849] sm:$0xf]
            %v854 = vmul.f32 %v843, %v850
            %v855 = vmul.f32 %v845, %v852
            %v856 = vsub.f32 %v854, %v855
            %v857 = vmul.f32 %v843, %v851
            %v858 = vmul.f32 %v845, %v853
            %v859 = vsub.f32 %v857, %v858
            %v860 = vmul.f32 %v845, %v850
            %v861 = vmul.f32 %v843, %v852
            %v862 = vadd.f32 %v860, %v861
            %v863 = vmul.f32 %v845, %v851
            %v864 = vmul.f32 %v843, %v853
            %v865 = vadd.f32 %v863, %v864
            %866 = vst [vmem:[%s846] sm:$0xf] %v856
            %867 = vst [vmem:[%s847] sm:$0xf] %v859
            %868 = vst [vmem:[%s848] sm:$0xf] %v862
            %869 = vst [vmem:[%s849] sm:$0xf] %v865
            %s870 = smov [#allocation12]
            %s871 = smov [#allocation18]
            %v872 = vld [vmem:[%s870] ss:$0 sm:$0xff]
            %s874 = scalar_lea.vmem %s870, 4294967295
            %v875 = vld [vmem:[%s874] sm:$0xe]
            %v876 = vlaneseq
            %v877 = vshrl.u32 %v876, 7
            %vm878 = vcmp.eq.s32.totalorder %v877, 0
            %v879 = vsel %vm878, %v872, %v875
            %s880 = scalar_lea.vmem %s870, 3
            %v881 = vld [vmem:[%s880] ss:$0 sm:$0xff]
            %882 = vst [vmem:[%s870] sm:$0xf] %v879
            %v883 = vld [vmem:[%s871] ss:$0 sm:$0xff]
            %s884 = scalar_lea.vmem %s870, 1
            %885 = vst [vmem:[%s884] sm:$0x1] %v883
            %s886 = scalar_lea.vmem %s871, 1
            %v887 = vld [vmem:[%s886] sm:$0x7]
            %v888 = vlaneseq
            %v889 = vshrl.u32 %v888, 7
            %vm890 = vcmp.eq.s32.totalorder %v889, 3
            %v891 = vsel %vm890, %v881, %v887
            %v892 = vld [vmem:[%s871] ss:$0 sm:$0xff]
            %893 = vst [vmem:[%s871] sm:$0xf] %v891
            %s894 = smov [#allocation15]
            %s895 = smov [#allocation20]
            %v896 = vld [vmem:[%s894] ss:$0 sm:$0xff]
            %s898 = scalar_lea.vmem %s894, 4294967295
            %v899 = vld [vmem:[%s898] sm:$0xe]
            %v900 = vlaneseq
            %v901 = vshrl.u32 %v900, 7
            %vm902 = vcmp.eq.s32.totalorder %v901, 0
            %v903 = vsel %vm902, %v896, %v899
            %s904 = scalar_lea.vmem %s894, 3
            %v905 = vld [vmem:[%s904] ss:$0 sm:$0xff]
            %906 = vst [vmem:[%s894] sm:$0xf] %v903
            %v907 = vld [vmem:[%s895] ss:$0 sm:$0xff]
            %s908 = scalar_lea.vmem %s894, 1
            %909 = vst [vmem:[%s908] sm:$0x1] %v907
            %s910 = scalar_lea.vmem %s895, 1
            %v911 = vld [vmem:[%s910] sm:$0x7]
            %v912 = vlaneseq
            %v913 = vshrl.u32 %v912, 7
            %vm914 = vcmp.eq.s32.totalorder %v913, 3
            %v915 = vsel %vm914, %v905, %v911
            %v916 = vld [vmem:[%s895] ss:$0 sm:$0xff]
            %917 = vst [vmem:[%s895] sm:$0xf] %v915
          $region152: #{custom-call.3} parent=144 // loop_footer
            %s478 = sadd.s32 1, %s474
          $region153: #{custom-call.3} parent=144 // loop_footer_branch
            %473 = sbr.rel target = $region149
          $region154: #{custom-call.3} parent=144 // loop_exit
            _
          %s918 = sadd.s32 %s376, 1
        $region145: #{custom-call.3} parent=139 // loop_footer
          _
        $region146: #{custom-call.3} parent=139 // loop_footer_branch
          %375 = sbr.rel target = $region142
        $region147: #{custom-call.3} parent=139 // loop_exit
          _
        %s921 = sand.u32 %s26, 7
        %s922 = scalar_lea.vmem [#allocation8], %s921
        %s923 = sand.u32 %s26, 7
        %s924 = scalar_lea.vmem [#allocation10], %s923
        %s925 = smov [#allocation23]
        %s926 = smov %s922
        %v927 = vlaneseq
        %v928 = vand.u32 %v927, 127
        %v929 = vmov %v928
        %v930 = vlaneseq
        %v931 = vshrl.u32 %v930, 7
        %v932 = vmov %v931
        %v933 = vld [vmem:[%s925] sm:$0xf]
        %vm936 = vcmp.eq.s32.totalorder %v932, %v929
        %v937 = vsel %vm936, %v933, 0.0
        %v938 = vrot.slane %v937, 4
        %v939 = vadd.f32 %v937, %v938
        %v940 = vrot.slane %v939, 2
        %v941 = vadd.f32 %v939, %v940
        %v942 = vrot.slane %v941, 1
        %v943 = vadd.f32 %v941, %v942
        %944 = vst [vmem:[%s926] sm:$0x1] %v943
        %s945 = smov [#allocation26]
        %s946 = smov %s924
        %v947 = vlaneseq
        %v948 = vand.u32 %v947, 127
        %v949 = vmov %v948
        %v950 = vlaneseq
        %v951 = vshrl.u32 %v950, 7
        %v952 = vmov %v951
        %v953 = vld [vmem:[%s945] sm:$0xf]
        %vm956 = vcmp.eq.s32.totalorder %v952, %v949
        %v957 = vsel %vm956, %v953, 0.0
        %v958 = vrot.slane %v957, 4
        %v959 = vadd.f32 %v957, %v958
        %v960 = vrot.slane %v959, 2
        %v961 = vadd.f32 %v959, %v960
        %v962 = vrot.slane %v961, 1
        %v963 = vadd.f32 %v961, %v962
        %964 = vst [vmem:[%s946] sm:$0x1] %v963
        %s966 = sshllo.u32 0, 4
        %v968 = vld [vmem:[#allocation8] sm:%s966]
        %s969 = sshllo.u32 0, 4
        %970 = vst [vmem:[%s288] sm:%s969] %v968
        %s972 = sshllo.u32 0, 4
        %v974 = vld [vmem:[#allocation10] sm:%s972]
        %s975 = sshllo.u32 0, 4
        %976 = vst [vmem:[%s294] sm:%s975] %v974
        %s978 = sshllo.u32 0, 4
        %v980 = vld [vmem:[#allocation12] sm:%s978]
        %s981 = sshllo.u32 0, 4
        %982 = vst [vmem:[%s299] sm:%s981] %v980
        %s984 = sshllo.u32 0, 4
        %v986 = vld [vmem:[#allocation15] sm:%s984]
        %s987 = sshllo.u32 0, 4
        %988 = vst [vmem:[%s304] sm:%s987] %v986
        %s990 = sshllo.u32 0, 4
        %v992 = vld [vmem:[#allocation18] sm:%s990]
        %s993 = sshllo.u32 0, 4
        %994 = vst [vmem:[%s309] sm:%s993] %v992
        %s996 = sshllo.u32 0, 4
        %v998 = vld [vmem:[#allocation20] sm:%s996]
        %s999 = sshllo.u32 0, 4
        %1000 = vst [vmem:[%s314] sm:%s999] %v998
        %s1001 = sand.u32 %s36, 1
        %s1002 = sand.u32 %s36, 1
        %s1003 = smul.addr %s1002, 4
        %s1004 = scalar_lea.vmem [#allocation9], %s1003
        %s1005 = sand.u32 %s64, 1
        %s1006 = sand.u32 %s64, 1
        %s1007 = smul.addr %s1006, 4
        %s1008 = scalar_lea.vmem [#allocation11], %s1007
        %s1009 = sand.u32 %s26, 1
        %s1010 = scalar_lea.sflag [#allocation14], %s1009
        %s1011 = sand.u32 %s26, 1
        %s1012 = smul.addr %s1011, 4
        %s1013 = scalar_lea.vmem [#allocation13], %s1012
        %s1014 = sand.u32 %s26, 1
        %s1015 = scalar_lea.sflag [#allocation17], %s1014
        %s1016 = sand.u32 %s26, 1
        %s1017 = smul.addr %s1016, 4
        %s1018 = scalar_lea.vmem [#allocation16], %s1017
        %s1019 = sand.u32 %s26, 1
        %s1020 = scalar_lea.sflag [#allocation17], %s1019
        %s1021 = sand.u32 %s26, 1
        %s1022 = smul.addr %s1021, 4
        %s1023 = scalar_lea.vmem [#allocation19], %s1022
        %s1024 = sand.u32 %s26, 1
        %s1025 = scalar_lea.sflag [#allocation22], %s1024
        %s1026 = sand.u32 %s26, 1
        %s1027 = smul.addr %s1026, 4
        %s1028 = scalar_lea.vmem [#allocation21], %s1027
        // Predicated region
        $region155: #{custom-call.3} parent=139 // pred_check
          %p1029 = pneg %p46
        $region156: #{custom-call.3} parent=139 // pred_check_branch
          %1031 = sbr.rel (%p1029) target = $region158
        $region157: #{custom-call.3} parent=139 // pred_region
          %s1032 = sshrl.u32 %s26, 3
          %s1033 = smul.addr %s1032, 4
          %s1034 = scalar_lea.vmem %s4, %s1033
          // Predicated region
          $region159: #{custom-call.3} parent=157 // pred_check
            _
          $region160: #{custom-call.3} parent=157 // pred_check_branch
            %1036 = sbr.rel (0) target = $region162
          $region161: #{custom-call.3} parent=157 // pred_region
            // Predicated region
            $region163: #{custom-call.3} parent=161 // pred_check
              _
            $region164: #{custom-call.3} parent=161 // pred_check_branch
              %1038 = sbr.rel target = $region166
            $region165: #{custom-call.3} parent=161 // pred_region
              // Predicated region
              $region178: #{custom-call.3} parent=165 // pred_check
                _
              $region179: #{custom-call.3} parent=165 // pred_check_branch
                %1053 = sbr.rel (0) target = $region181
              $region180: #{custom-call.3} parent=165 // pred_region
                loop: start=0, step=1, limit=1
                $region182: #{custom-call.3} parent=180 // loop_pre_header
                  _
                $region183: #{custom-call.3} parent=180 // loop_header
                  %s1056 = sphi 0, %s1060
                  %p1057 = scmp.ge.s32.totalorder %s1056, 1
                  %s1061 = sphi %s1004, %s1004
                  %s1062 = sphi %s1034, %s1034
                $region184: #{custom-call.3} parent=180 // loop_header_branch
                  %1059 = sbr.rel (%p1057) target = $region188
                $region185: #{custom-call.3} parent=180 // loop_body
                  %v1063 = vld [vmem:[%s1061] sm:$0xf]
                  %1064 = vst [vmem:[%s1062] sm:$0xf] %v1063
                $region186: #{custom-call.3} parent=180 // loop_footer
                  %s1060 = sadd.s32 1, %s1056
                $region187: #{custom-call.3} parent=180 // loop_footer_branch
                  %1055 = sbr.rel target = $region183
                $region188: #{custom-call.3} parent=180 // loop_exit
                  _
              $region181: #{custom-call.3} parent=165 // pred_fallthru
                _
            $region166: #{custom-call.3} parent=161 // pred_fallthru
              _
            // Predicated region
            $region167: #{custom-call.3} parent=161 // pred_check
              _
            $region168: #{custom-call.3} parent=161 // pred_check_branch
              %1040 = sbr.rel (0) target = $region170
            $region169: #{custom-call.3} parent=161 // pred_region
              loop: start=0, step=1, limit=1
              $region171: #{custom-call.3} parent=169 // loop_pre_header
                _
              $region172: #{custom-call.3} parent=169 // loop_header
                %s1043 = sphi 0, %s1047
                %p1044 = scmp.ge.s32.totalorder %s1043, 1
                %s1048 = sphi %s1004, %s1004
                %s1049 = sphi %s1034, %s1034
              $region173: #{custom-call.3} parent=169 // loop_header_branch
                %1046 = sbr.rel (%p1044) target = $region177
              $region174: #{custom-call.3} parent=169 // loop_body
                %v1050 = vld [vmem:[%s1048] sm:$0xf]
                %1051 = vst [vmem:[%s1049] sm:$0xf] %v1050
              $region175: #{custom-call.3} parent=169 // loop_footer
                %s1047 = sadd.s32 1, %s1043
              $region176: #{custom-call.3} parent=169 // loop_footer_branch
                %1042 = sbr.rel target = $region172
              $region177: #{custom-call.3} parent=169 // loop_exit
                _
            $region170: #{custom-call.3} parent=161 // pred_fallthru
              _
          $region162: #{custom-call.3} parent=157 // pred_fallthru
            _
          %1065 = vnop
        $region158: #{custom-call.3} parent=139 // pred_fallthru
          _
        // Predicated region
        $region189: #{custom-call.3} parent=139 // pred_check
          %p1066 = pneg %p74
        $region190: #{custom-call.3} parent=139 // pred_check_branch
          %1068 = sbr.rel (%p1066) target = $region192
        $region191: #{custom-call.3} parent=139 // pred_region
          %s1069 = sshrl.u32 %s26, 3
          %s1070 = smul.addr %s1069, 4
          %s1071 = scalar_lea.vmem %s5, %s1070
          // Predicated region
          $region193: #{custom-call.3} parent=191 // pred_check
            _
          $region194: #{custom-call.3} parent=191 // pred_check_branch
            %1073 = sbr.rel (0) target = $region196
          $region195: #{custom-call.3} parent=191 // pred_region
            // Predicated region
            $region197: #{custom-call.3} parent=195 // pred_check
              _
            $region198: #{custom-call.3} parent=195 // pred_check_branch
              %1075 = sbr.rel target = $region200
            $region199: #{custom-call.3} parent=195 // pred_region
              // Predicated region
              $region212: #{custom-call.3} parent=199 // pred_check
                _
              $region213: #{custom-call.3} parent=199 // pred_check_branch
                %1090 = sbr.rel (0) target = $region215
              $region214: #{custom-call.3} parent=199 // pred_region
                loop: start=0, step=1, limit=1
                $region216: #{custom-call.3} parent=214 // loop_pre_header
                  _
                $region217: #{custom-call.3} parent=214 // loop_header
                  %s1093 = sphi 0, %s1097
                  %p1094 = scmp.ge.s32.totalorder %s1093, 1
                  %s1098 = sphi %s1008, %s1008
                  %s1099 = sphi %s1071, %s1071
                $region218: #{custom-call.3} parent=214 // loop_header_branch
                  %1096 = sbr.rel (%p1094) target = $region222
                $region219: #{custom-call.3} parent=214 // loop_body
                  %v1100 = vld [vmem:[%s1098] sm:$0xf]
                  %1101 = vst [vmem:[%s1099] sm:$0xf] %v1100
                $region220: #{custom-call.3} parent=214 // loop_footer
                  %s1097 = sadd.s32 1, %s1093
                $region221: #{custom-call.3} parent=214 // loop_footer_branch
                  %1092 = sbr.rel target = $region217
                $region222: #{custom-call.3} parent=214 // loop_exit
                  _
              $region215: #{custom-call.3} parent=199 // pred_fallthru
                _
            $region200: #{custom-call.3} parent=195 // pred_fallthru
              _
            // Predicated region
            $region201: #{custom-call.3} parent=195 // pred_check
              _
            $region202: #{custom-call.3} parent=195 // pred_check_branch
              %1077 = sbr.rel (0) target = $region204
            $region203: #{custom-call.3} parent=195 // pred_region
              loop: start=0, step=1, limit=1
              $region205: #{custom-call.3} parent=203 // loop_pre_header
                _
              $region206: #{custom-call.3} parent=203 // loop_header
                %s1080 = sphi 0, %s1084
                %p1081 = scmp.ge.s32.totalorder %s1080, 1
                %s1085 = sphi %s1008, %s1008
                %s1086 = sphi %s1071, %s1071
              $region207: #{custom-call.3} parent=203 // loop_header_branch
                %1083 = sbr.rel (%p1081) target = $region211
              $region208: #{custom-call.3} parent=203 // loop_body
                %v1087 = vld [vmem:[%s1085] sm:$0xf]
                %1088 = vst [vmem:[%s1086] sm:$0xf] %v1087
              $region209: #{custom-call.3} parent=203 // loop_footer
                %s1084 = sadd.s32 1, %s1080
              $region210: #{custom-call.3} parent=203 // loop_footer_branch
                %1079 = sbr.rel target = $region206
              $region211: #{custom-call.3} parent=203 // loop_exit
                _
            $region204: #{custom-call.3} parent=195 // pred_fallthru
              _
          $region196: #{custom-call.3} parent=191 // pred_fallthru
            _
          %1102 = vnop
        $region192: #{custom-call.3} parent=139 // pred_fallthru
          _
        %s1104 = ssub.s32 64, 64
        %1105 = vsyncadd %s1010, %s1104
        %s1106 = smul.addr %s26, 64
        %s1107 = scalar_lea.hbm %s6, %s1106
        %s1109 = sshll.u32 %s1013, 4
        %s1110 = int_to_ptr.vmem [resolvable:$true] %s1109
        %1112 = dma.vmem_to_hbm [thread:$0]  %s1110, 64, %s1107, %s1010
        %s1114 = ssub.s32 64, 64
        %1115 = vsyncadd %s1015, %s1114
        %s1116 = smul.addr %s26, 64
        %s1117 = scalar_lea.hbm %s7, %s1116
        %s1119 = sshll.u32 %s1018, 4
        %s1120 = int_to_ptr.vmem [resolvable:$true] %s1119
        %1122 = dma.vmem_to_hbm [thread:$0]  %s1120, 64, %s1117, %s1015
        %s1124 = ssub.s32 64, 64
        %1125 = vsyncadd %s1020, %s1124
        %s1126 = smul.addr %s26, 64
        %s1127 = scalar_lea.hbm %s8, %s1126
        %s1129 = sshll.u32 %s1023, 4
        %s1130 = int_to_ptr.vmem [resolvable:$true] %s1129
        %1132 = dma.vmem_to_hbm [thread:$0]  %s1130, 64, %s1127, %s1020
        %s1134 = ssub.s32 64, 64
        %1135 = vsyncadd %s1025, %s1134
        %s1136 = smul.addr %s26, 64
        %s1137 = scalar_lea.hbm %s9, %s1136
        %s1139 = sshll.u32 %s1028, 4
        %s1140 = int_to_ptr.vmem [resolvable:$true] %s1139
        %1142 = dma.vmem_to_hbm [thread:$0]  %s1140, 64, %s1137, %s1025
      $region140: #{custom-call.3} parent=5 // pred_fallthru
        _
      %p1143 = scmp.le.s32.totalorder 2, %s21
      // Predicated region
      $region223: #{custom-call.3} parent=5 // pred_check
        %p1144 = pneg %p1143
      $region224: #{custom-call.3} parent=5 // pred_check_branch
        %1146 = sbr.rel (%p1144) target = $region226
      $region225: #{custom-call.3} parent=5 // pred_region
        %s1147 = ssub.s32 %s21, 2
        // Predicated region
        $region227: #{custom-call.3} parent=225 // pred_check
          %p1148 = pneg %p52
        $region228: #{custom-call.3} parent=225 // pred_check_branch
          %1150 = sbr.rel (%p1148) target = $region230
        $region229: #{custom-call.3} parent=225 // pred_region
          %s1151 = sand.u32 %s37, 1
          %s1152 = sand.u32 %s37, 1
          %s1153 = smul.addr %s1152, 4
          %s1154 = scalar_lea.vmem [#allocation9], %s1153
        $region230: #{custom-call.3} parent=225 // pred_fallthru
          _
        // Predicated region
        $region231: #{custom-call.3} parent=225 // pred_check
          %p1155 = pneg %p80
        $region232: #{custom-call.3} parent=225 // pred_check_branch
          %1157 = sbr.rel (%p1155) target = $region234
        $region233: #{custom-call.3} parent=225 // pred_region
          %s1158 = sand.u32 %s65, 1
          %s1159 = sand.u32 %s65, 1
          %s1160 = smul.addr %s1159, 4
          %s1161 = scalar_lea.vmem [#allocation11], %s1160
        $region234: #{custom-call.3} parent=225 // pred_fallthru
          _
        %s1162 = sand.u32 %s27, 1
        %s1163 = scalar_lea.sflag [#allocation14], %s1162
        %s1164 = sand.u32 %s27, 1
        %s1165 = smul.addr %s1164, 4
        %s1166 = scalar_lea.vmem [#allocation13], %s1165
        %1167 = dma.done %s1163, 64
        %s1168 = sand.u32 %s27, 1
        %s1169 = scalar_lea.sflag [#allocation17], %s1168
        %s1170 = sand.u32 %s27, 1
        %s1171 = smul.addr %s1170, 4
        %s1172 = scalar_lea.vmem [#allocation16], %s1171
        %1173 = dma.done %s1169, 64
        %s1174 = sand.u32 %s27, 1
        %s1175 = scalar_lea.sflag [#allocation17], %s1174
        %s1176 = sand.u32 %s27, 1
        %s1177 = smul.addr %s1176, 4
        %s1178 = scalar_lea.vmem [#allocation19], %s1177
        %1179 = dma.done %s1175, 64
        %s1180 = sand.u32 %s27, 1
        %s1181 = scalar_lea.sflag [#allocation22], %s1180
        %s1182 = sand.u32 %s27, 1
        %s1183 = smul.addr %s1182, 4
        %s1184 = scalar_lea.vmem [#allocation21], %s1183
        %1185 = dma.done %s1181, 64
      $region226: #{custom-call.3} parent=5 // pred_fallthru
        _
    $region6: #{custom-call.3} parent=1 // loop_footer
      %s25 = sadd.s32 1, %s21
    $region7: #{custom-call.3} parent=1 // loop_footer_branch
      %20 = sbr.rel target = $region3
    $region8: #{custom-call.3} parent=1 // loop_exit
      _
    %1186 = vsyncpa [#allocation14], 1
    %s1187 = scalar_lea.sflag [#allocation14], 1
    %1188 = vsyncpa %s1187, 1
    %1189 = vsyncpa [#allocation17], 1
    %s1190 = scalar_lea.sflag [#allocation17], 1
    %1191 = vsyncpa %s1190, 1
    %1192 = vsyncpa [#allocation22], 1
    %s1193 = scalar_lea.sflag [#allocation22], 1
    %1194 = vsyncpa %s1193, 1

// kernel: device_path.1
$region0: #{device_path.1}
  #allocation0 [shape = 'u32[]', space=smem, size = 0x4, offset = 0x4, fixed_abs, tag = 'smem constant byte address 0x4 - core index']
  #allocation1 [shape = 'u32[144,128]{1,0:T(1,128)}', space=vmem, size = 0x12000, scoped, tag = 'internal scratch']
  %s0 = inlined_call_operand.vmem [shape: f32[4,8,32], index: 0, kind: input, shape index: {}]
  %s1 = inlined_call_operand.vmem [shape: f32[4,8,1], index: 1, kind: input, shape index: {}]
  %s2 = inlined_call_operand.vmem [shape: f32[4,8,8], index: 2, kind: output, shape index: {}]
  %s3 = sld [smem:[#allocation0]]
  $region41: #{device_path.1} parent=0
    _
  %s5 = ssub.s32 1, %s3
  %s6 = scalar_select 0, %s5, %s3
  loop: start=0, step=1, limit=4
  $region2: #{device_path.1} parent=0 // loop_pre_header
    _
  $region3: #{device_path.1} parent=0 // loop_header
    %s8 = sphi 0, %s12
    %p9 = scmp.ge.s32.totalorder %s8, 4
    %s18 = sphi 0, %s20
    %s21 = sphi 0, %s18
    %s22 = sphi 0, %s21
    %s38 = sphi 0, %s22
    %s44 = sphi 0, %s46
    %s47 = sphi 0, %s44
    %s48 = sphi 0, %s47
    %s64 = sphi 0, %s48
    %s70 = sphi 0, %s72
    %s73 = sphi 0, %s70
    %s74 = sphi 0, %s73
    %s90 = sphi 0, %s74
  $region4: #{device_path.1} parent=0 // loop_header_branch
    %11 = sbr.rel (%p9) target = $region8
  $region5: #{device_path.1} parent=0 // loop_body
    %s13 = ssub.s32 %s8, 1
    %s14 = ssub.s32 %s8, 2
    %s15 = sadd.s32 %s8, 1
    %s16 = ssub.s32 %s8, %s15
    %p17 = scmp.eq.s32.totalorder %s16, 0
    %s19 = sadd.s32 %s18, 1
    %s20 = scalar_select %p17, %s18, %s19
    %p23 = pneg %p17
    %p24 = scmp.eq.s32.totalorder %s8, 1
    %p25 = por %p23, %p24
    %p26 = scmp.ne.s32.totalorder %s18, %s21
    %p27 = scmp.eq.s32.totalorder %s8, 0
    %p28 = por %p26, %p27
    %p29 = scmp.ne.s32.totalorder %s18, %s21
    %p30 = scmp.eq.s32.totalorder %s13, 1
    %p31 = por %p29, %p30
    %p32 = scmp.ne.s32.totalorder %s21, %s22
    %p33 = scmp.eq.s32.totalorder %s13, 0
    %p34 = por %p32, %p33
    %p35 = scmp.ne.s32.totalorder %s21, %s22
    %p36 = scmp.eq.s32.totalorder %s14, 1
    %p37 = por %p35, %p36
    %p39 = scmp.ne.s32.totalorder %s22, %s38
    %p40 = scmp.eq.s32.totalorder %s14, 0
    %p41 = por %p39, %p40
    %s42 = ssub.s32 %s8, %s15
    %p43 = scmp.eq.s32.totalorder %s42, 0
    %s45 = sadd.s32 %s44, 1
    %s46 = scalar_select %p43, %s44, %s45
    %p49 = pneg %p43
    %p50 = scmp.eq.s32.totalorder %s8, 1
    %p51 = por %p49, %p50
    %p52 = scmp.ne.s32.totalorder %s44, %s47
    %p53 = scmp.eq.s32.totalorder %s8, 0
    %p54 = por %p52, %p53
    %p55 = scmp.ne.s32.totalorder %s44, %s47
    %p56 = scmp.eq.s32.totalorder %s13, 1
    %p57 = por %p55, %p56
    %p58 = scmp.ne.s32.totalorder %s47, %s48
    %p59 = scmp.eq.s32.totalorder %s13, 0
    %p60 = por %p58, %p59
    %p61 = scmp.ne.s32.totalorder %s47, %s48
    %p62 = scmp.eq.s32.totalorder %s14, 1
    %p63 = por %p61, %p62
    %p65 = scmp.ne.s32.totalorder %s48, %s64
    %p66 = scmp.eq.s32.totalorder %s14, 0
    %p67 = por %p65, %p66
    %s68 = ssub.s32 %s8, %s15
    %p69 = scmp.eq.s32.totalorder %s68, 0
    %s71 = sadd.s32 %s70, 1
    %s72 = scalar_select %p69, %s70, %s71
    %p75 = pneg %p69
    %p76 = scmp.eq.s32.totalorder %s8, 1
    %p77 = por %p75, %p76
    %p78 = scmp.ne.s32.totalorder %s70, %s73
    %p79 = scmp.eq.s32.totalorder %s8, 0
    %p80 = por %p78, %p79
    %p81 = scmp.ne.s32.totalorder %s70, %s73
    %p82 = scmp.eq.s32.totalorder %s13, 1
    %p83 = por %p81, %p82
    %p84 = scmp.ne.s32.totalorder %s73, %s74
    %p85 = scmp.eq.s32.totalorder %s13, 0
    %p86 = por %p84, %p85
    %p87 = scmp.ne.s32.totalorder %s73, %s74
    %p88 = scmp.eq.s32.totalorder %s14, 1
    %p89 = por %p87, %p88
    %p91 = scmp.ne.s32.totalorder %s74, %s90
    %p92 = scmp.eq.s32.totalorder %s14, 0
    %p93 = por %p91, %p92
    %p94 = scmp.le.s32.totalorder 1, %s8
    %p95 = scmp.lt.s32.totalorder %s8, 3
    %p96 = pnand %p94, %p95
    %p97 = pneg %p96
    // Predicated region
    $region9: #{device_path.1} parent=5 // pred_check
      _
    $region10: #{device_path.1} parent=5 // pred_check_branch
      %99 = sbr.rel (%p96) target = $region12
    $region11: #{device_path.1} parent=5 // pred_region
      %s100 = ssub.s32 %s8, 1
    $region12: #{device_path.1} parent=5 // pred_fallthru
      _
    %p101 = scmp.lt.s32.totalorder %s8, 2
    // Predicated region
    $region13: #{device_path.1} parent=5 // pred_check
      %p102 = pneg %p101
    $region14: #{device_path.1} parent=5 // pred_check_branch
      %104 = sbr.rel (%p102) target = $region16
    $region15: #{device_path.1} parent=5 // pred_region
      // Predicated region
      $region17: #{device_path.1} parent=15 // pred_check
        %p105 = pneg %p28
      $region18: #{device_path.1} parent=15 // pred_check_branch
        %107 = sbr.rel (%p105) target = $region20
      $region19: #{device_path.1} parent=15 // pred_region
        %s108 = smul.u32 2, %s8
        %p109 = scmp.lt.s32.totalorder %s108, 3
        %s110 = scalar_select %p109, %s108, 3
        %s111 = smul.addr %s110, 8
        %s112 = scalar_lea.vmem %s0, %s111
        %s113 = smul.u32 2, %s8
      $region20: #{device_path.1} parent=15 // pred_fallthru
        _
      // Predicated region
      $region21: #{device_path.1} parent=15 // pred_check
        %p114 = pneg %p54
      $region22: #{device_path.1} parent=15 // pred_check_branch
        %116 = sbr.rel (%p114) target = $region24
      $region23: #{device_path.1} parent=15 // pred_region
        %s117 = smul.u32 2, %s8
        %p118 = scmp.lt.s32.totalorder %s117, 3
        %s119 = scalar_select %p118, %s117, 3
        %s120 = smul.addr %s119, 8
        %s121 = scalar_lea.vmem %s1, %s120
        %s122 = smul.u32 2, %s8
      $region24: #{device_path.1} parent=15 // pred_fallthru
        _
    $region16: #{device_path.1} parent=5 // pred_fallthru
      _
    %p123 = scmp.le.s32.totalorder 1, %s8
    %p124 = scmp.lt.s32.totalorder %s8, 3
    %p125 = pnand %p123, %p124
    %p126 = pneg %p125
    // Predicated region
    $region25: #{device_path.1} parent=5 // pred_check
      _
    $region26: #{device_path.1} parent=5 // pred_check_branch
      %128 = sbr.rel (%p125) target = $region28
    $region27: #{device_path.1} parent=5 // pred_region
      %s129 = ssub.s32 %s8, 1
      %s130 = smul.u32 2, %s13
      %p131 = scmp.lt.s32.totalorder %s130, 3
      %s132 = scalar_select %p131, %s130, 3
      %s133 = smul.addr %s132, 8
      %s134 = scalar_lea.vmem %s0, %s133
      %p135 = pneg %p34
      %p136 = pneg %p31
      %s137 = smul.u32 2, %s13
      %p138 = scmp.lt.s32.totalorder %s137, 3
      %s139 = scalar_select %p138, %s137, 3
      %s140 = smul.addr %s139, 8
      %s141 = scalar_lea.vmem %s1, %s140
      %p142 = pneg %p60
      %p143 = pneg %p57
      %p144 = pneg %p86
      %p145 = pneg %p83
      %s146 = smul.u32 2, %s13
      %p147 = scmp.lt.s32.totalorder %s146, 3
      %s148 = scalar_select %p147, %s146, 3
      %s149 = smul.addr %s148, 8
      %s150 = scalar_lea.vmem %s2, %s149
      %s151 = smul.u32 2, %s13
      %p152 = scmp.lt.s32.totalorder %s151, 3
      %s153 = scalar_select %p152, %s151, 3
      %s154 = smul.addr %s153, 8
      %s155 = scalar_lea.vmem %s0, %s154
      %s156 = smul.u32 2, %s13
      %s157 = smul.u32 2, %s13
      %p158 = scmp.lt.s32.totalorder %s157, 3
      %s159 = scalar_select %p158, %s157, 3
      %s160 = smul.addr %s159, 8
      %s161 = scalar_lea.vmem %s1, %s160
      %s162 = smul.u32 2, %s13
      %s163 = smul.u32 2, %s13
      %p164 = scmp.lt.s32.totalorder %s163, 3
      %s165 = scalar_select %p164, %s163, 3
      %s166 = smul.addr %s165, 8
      %s167 = scalar_lea.vmem %s2, %s166
      %s168 = smul.u32 2, %s13
      %v169 = vld [vmem:[%s155] sm:$0xff]
      %v170 = vld [vmem:[%s155 + $0x8] sm:$0xff]
      %v171 = vmul.f32 %v169, %v169
      %v172 = vmul.f32 %v170, %v170
      %vm173 = vcmask 261120
      %v174 = vsel %vm173, %v171, 0.0
      %175 = vadd.xlane.f32.xlu0 %v174
      %v176 = vpop.xlane.xlu0 %175
      %v177 = vsel %vm173, %v172, 0.0
      %178 = vadd.xlane.f32.xlu0 %v177
      %v179 = vpop.xlane.xlu0 %178
      %v180 = vrot.slane %v176, 4
      %v181 = vadd.f32 %v176, %v180
      %v182 = vrot.slane %v181, 2
      %v183 = vadd.f32 %v181, %v182
      %v184 = vrot.slane %v183, 1
      %v185 = vadd.f32 %v183, %v184
      %v186 = vrot.slane %v179, 4
      %v187 = vadd.f32 %v179, %v186
      %v188 = vrot.slane %v187, 2
      %v189 = vadd.f32 %v187, %v188
      %v190 = vrot.slane %v189, 1
      %v191 = vadd.f32 %v189, %v190
      %v192 = vlaneseq
      %v193 = vshrl.u32 %v192, 7
      %v194 = vlaneseq
      %v195 = vand.u32 %v194, 127
      %vm196 = vcmp.eq.s32.totalorder %v193, %v195
      %v197 = vsel %vm196, 1, 0
      %v198 = vcvt.s32.f32 %v197
      %v199 = vadd.f32 %v185, 1.0
      %v200 = vadd.f32 %v191, 1.0
      %v201 = vld [vmem:[%s161] sm:$0xff]
      %v202 = vld [vmem:[%s161 + $0x8] sm:$0xff]
      %v203 = vmul.f32 %v199, %v201
      %v204 = vmul.f32 %v200, %v202
      %206 = vset.pattern.permute.xlu0 0
      %207 = vperm.xlu0 %206, %v203
      %v208 = vpop.permute.xlu0 %207
      %211 = vset.pattern.permute.xlu0 0
      %212 = vperm.xlu0 %211, %v204
      %v213 = vpop.permute.xlu0 %212
      %v215 = vmul.f32 %v208, %v198
      %v216 = vmul.f32 %v213, %v198
      %v218 = vsel %vm173, %v169, 0
      %220 = vmatprep.subr.mxu0 0.0
      %221 = vmatpush1.xpose.msra.mxu0 %v218
      %222 = vmatprep.subr.mxu0 0.0
      %223 = vmatpush1.xpose.msra.mxu0 0.0
      %224 = vmatprep.subr.mxu0 0.0
      %225 = vmatpush1.xpose.msra.mxu0 0.0
      %226 = vmatprep.subr.mxu0 0.0
      %227 = vmatpush1.xpose.msra.mxu0 0.0
      %228 = vmatprep.subr.mxu0 0.0
      %229 = vmatpush1.xpose.msra.mxu0 0.0
      %230 = vmatprep.subr.mxu0 0.0
      %231 = vmatpush1.xpose.msra.mxu0 0.0
      %232 = vmatprep.subr.mxu0 0.0
      %233 = vmatpush1.xpose.msra.mxu0 0.0
      %234 = vmatprep.subr.mxu0 0.0
      %235 = vmatpush1.xpose.msra.mxu0 0.0
      %236 = vmatprep.subr.mxu0 0.0
      %237 = vmatpush1.xpose.msra.mxu0 0.0
      %238 = vmatprep.subr.mxu0 0.0
      %239 = vmatpush1.xpose.msra.mxu0 0.0
      %240 = vmatprep.subr.mxu0 0.0
      %241 = vmatpush1.xpose.msra.mxu0 0.0
      %242 = vmatprep.subr.mxu0 0.0
      %243 = vmatpush1.xpose.msra.mxu0 0.0
      %244 = vmatprep.subr.mxu0 0.0
      %245 = vmatpush1.xpose.msra.mxu0 0.0
      %246 = vmatprep.subr.mxu0 0.0
      %247 = vmatpush1.xpose.msra.mxu0 0.0
      %248 = vmatprep.subr.mxu0 0.0
      %249 = vmatpush1.xpose.msra.mxu0 0.0
      %250 = vmatprep.subr.mxu0 0.0
      %251 = vmatpush1.xpose.msra.mxu0 0.0
      %252 = vmatprep.subr.mxu0 0.0
      %253 = vmatpush1.xpose.msra.mxu0 0.0
      %254 = vmatprep.subr.mxu0 0.0
      %255 = vmatpush1.xpose.msra.mxu0 0.0
      %256 = vmatprep.subr.mxu0 0.0
      %257 = vmatpush1.xpose.msra.mxu0 0.0
      %258 = vmatprep.subr.mxu0 0.0
      %259 = vmatpush1.xpose.msra.mxu0 0.0
      %260 = vmatprep.subr.mxu0 0.0
      %261 = vmatpush1.xpose.msra.mxu0 0.0
      %262 = vmatprep.subr.mxu0 0.0
      %263 = vmatpush1.xpose.msra.mxu0 0.0
      %264 = vmatprep.subr.mxu0 0.0
      %265 = vmatpush1.xpose.msra.mxu0 0.0
      %266 = vmatprep.subr.mxu0 0.0
      %267 = vmatpush1.xpose.msra.mxu0 0.0
      %268 = vmatprep.subr.mxu0 0.0
      %269 = vmatpush1.xpose.msra.mxu0 0.0
      %270 = vmatprep.subr.mxu0 0.0
      %271 = vmatpush1.xpose.msra.mxu0 0.0
      %272 = vmatprep.subr.mxu0 0.0
      %273 = vmatpush1.xpose.msra.mxu0 0.0
      %274 = vmatprep.subr.mxu0 0.0
      %275 = vmatpush1.xpose.msra.mxu0 0.0
      %276 = vmatprep.subr.mxu0 0.0
      %277 = vmatpush1.xpose.msra.mxu0 0.0
      %278 = vmatprep.subr.mxu0 0.0
      %279 = vmatpush1.xpose.msra.mxu0 0.0
      %280 = vmatprep.subr.mxu0 0.0
      %281 = vmatpush1.xpose.msra.mxu0 0.0
      %282 = vmatprep.subr.mxu0 0.0
      %283 = vmatpush1.xpose.msra.mxu0 0.0
      %284 = vmatprep.mubr.f32.mxu0 0.0
      %285 = vmatmul.mubr.f32.gmra.mrb[0].mxu0 %v218
      %v286 = vpop.f32.mrb[0].mxu0
      %v287 = vadd.f32 %v215, %v286
      %v288 = vpop.f32.mrb[0].mxu0
      %289 = vdwg.mxu0
      %v291 = vsel %vm173, %v170, 0
      %293 = vmatprep.subr.mxu0 0.0
      %294 = vmatpush1.xpose.msra.mxu0 %v291
      %295 = vmatprep.subr.mxu0 0.0
      %296 = vmatpush1.xpose.msra.mxu0 0.0
      %297 = vmatprep.subr.mxu0 0.0
      %298 = vmatpush1.xpose.msra.mxu0 0.0
      %299 = vmatprep.subr.mxu0 0.0
      %300 = vmatpush1.xpose.msra.mxu0 0.0
      %301 = vmatprep.subr.mxu0 0.0
      %302 = vmatpush1.xpose.msra.mxu0 0.0
      %303 = vmatprep.subr.mxu0 0.0
      %304 = vmatpush1.xpose.msra.mxu0 0.0
      %305 = vmatprep.subr.mxu0 0.0
      %306 = vmatpush1.xpose.msra.mxu0 0.0
      %307 = vmatprep.subr.mxu0 0.0
      %308 = vmatpush1.xpose.msra.mxu0 0.0
      %309 = vmatprep.subr.mxu0 0.0
      %310 = vmatpush1.xpose.msra.mxu0 0.0
      %311 = vmatprep.subr.mxu0 0.0
      %312 = vmatpush1.xpose.msra.mxu0 0.0
      %313 = vmatprep.subr.mxu0 0.0
      %314 = vmatpush1.xpose.msra.mxu0 0.0
      %315 = vmatprep.subr.mxu0 0.0
      %316 = vmatpush1.xpose.msra.mxu0 0.0
      %317 = vmatprep.subr.mxu0 0.0
      %318 = vmatpush1.xpose.msra.mxu0 0.0
      %319 = vmatprep.subr.mxu0 0.0
      %320 = vmatpush1.xpose.msra.mxu0 0.0
      %321 = vmatprep.subr.mxu0 0.0
      %322 = vmatpush1.xpose.msra.mxu0 0.0
      %323 = vmatprep.subr.mxu0 0.0
      %324 = vmatpush1.xpose.msra.mxu0 0.0
      %325 = vmatprep.subr.mxu0 0.0
      %326 = vmatpush1.xpose.msra.mxu0 0.0
      %327 = vmatprep.subr.mxu0 0.0
      %328 = vmatpush1.xpose.msra.mxu0 0.0
      %329 = vmatprep.subr.mxu0 0.0
      %330 = vmatpush1.xpose.msra.mxu0 0.0
      %331 = vmatprep.subr.mxu0 0.0
      %332 = vmatpush1.xpose.msra.mxu0 0.0
      %333 = vmatprep.subr.mxu0 0.0
      %334 = vmatpush1.xpose.msra.mxu0 0.0
      %335 = vmatprep.subr.mxu0 0.0
      %336 = vmatpush1.xpose.msra.mxu0 0.0
      %337 = vmatprep.subr.mxu0 0.0
      %338 = vmatpush1.xpose.msra.mxu0 0.0
      %339 = vmatprep.subr.mxu0 0.0
      %340 = vmatpush1.xpose.msra.mxu0 0.0
      %341 = vmatprep.subr.mxu0 0.0
      %342 = vmatpush1.xpose.msra.mxu0 0.0
      %343 = vmatprep.subr.mxu0 0.0
      %344 = vmatpush1.xpose.msra.mxu0 0.0
      %345 = vmatprep.subr.mxu0 0.0
      %346 = vmatpush1.xpose.msra.mxu0 0.0
      %347 = vmatprep.subr.mxu0 0.0
      %348 = vmatpush1.xpose.msra.mxu0 0.0
      %349 = vmatprep.subr.mxu0 0.0
      %350 = vmatpush1.xpose.msra.mxu0 0.0
      %351 = vmatprep.subr.mxu0 0.0
      %352 = vmatpush1.xpose.msra.mxu0 0.0
      %353 = vmatprep.subr.mxu0 0.0
      %354 = vmatpush1.xpose.msra.mxu0 0.0
      %355 = vmatprep.subr.mxu0 0.0
      %356 = vmatpush1.xpose.msra.mxu0 0.0
      %357 = vmatprep.mubr.f32.mxu0 0.0
      %358 = vmatmul.mubr.f32.gmra.mrb[0].mxu0 %v291
      %v359 = vpop.f32.mrb[0].mxu0
      %v360 = vadd.f32 %v216, %v359
      %v361 = vpop.f32.mrb[0].mxu0
      %362 = vdwg.mxu0
      %vm363 = vcmask 64512
      %364 = vst.msk [vmem:[%s167] sm:$0xff] %vm363, %v287
      %365 = vst.msk [vmem:[%s167 + $0x8] sm:$0xff] %vm363, %v360
      %s366 = smul.u32 2, %s13
      %p367 = scmp.lt.s32.totalorder %s366, 3
      %s368 = scalar_select %p367, %s366, 3
      %s369 = smul.addr %s368, 8
      %s370 = scalar_lea.vmem %s2, %s369
      // Predicated region
      $region29: #{device_path.1} parent=27 // pred_check
        %p371 = pneg %p83
      $region30: #{device_path.1} parent=27 // pred_check_branch
        %373 = sbr.rel (%p371) target = $region32
      $region31: #{device_path.1} parent=27 // pred_region
        %s374 = smul.u32 2, %s13
      $region32: #{device_path.1} parent=27 // pred_fallthru
        _
    $region28: #{device_path.1} parent=5 // pred_fallthru
      _
    %p375 = scmp.le.s32.totalorder 2, %s8
    // Predicated region
    $region33: #{device_path.1} parent=5 // pred_check
      %p376 = pneg %p375
    $region34: #{device_path.1} parent=5 // pred_check_branch
      %378 = sbr.rel (%p376) target = $region36
    $region35: #{device_path.1} parent=5 // pred_region
      %s379 = ssub.s32 %s8, 2
      // Predicated region
      $region37: #{device_path.1} parent=35 // pred_check
        %p380 = pneg %p89
      $region38: #{device_path.1} parent=35 // pred_check_branch
        %382 = sbr.rel (%p380) target = $region40
      $region39: #{device_path.1} parent=35 // pred_region
        %s383 = smul.u32 2, %s14
        %p384 = scmp.lt.s32.totalorder %s383, 3
        %s385 = scalar_select %p384, %s383, 3
        %s386 = smul.addr %s385, 8
        %s387 = scalar_lea.vmem %s2, %s386
      $region40: #{device_path.1} parent=35 // pred_fallthru
        _
    $region36: #{device_path.1} parent=5 // pred_fallthru
      _
  $region6: #{device_path.1} parent=0 // loop_footer
    %s12 = sadd.s32 1, %s8
  $region7: #{device_path.1} parent=0 // loop_footer_branch
    %7 = sbr.rel target = $region3
  $region8: #{device_path.1} parent=0 // loop_exit
    _

</llo_original>
